<compile_context>
chip_gen: v7x
topology: tpu7x:2x2x1
jax: 0.10.0
libtpu: 0.0.40
codegen_flags: <defaults>
</compile_context>

<pallas_src>
import jax
import jax.numpy as jnp
from jax import lax
from jax.experimental import pallas as pl
from jax.experimental.pallas import tpu as pltpu

# ----------------------------- model hyperparams -----------------------------
VOCAB_SIZE = 64
OUTPUT_SIZE = 4
EMBEDDING_DIM = 32
HIDDEN_DIM = 32
N_LAYERS = 2
BATCH = 2
SEQ_LEN = 8

_VMEM_SPEC = pl.BlockSpec(memory_space=pltpu.MemorySpace.VMEM)


# ------------------------------ fused Pallas kernel ---------------------------
def _fused_forward_kernel(*refs):
    """Whole forward pass in one kernel.

    Inputs (in order):
      ids_ref : (T*B, 1) int32   time-major flattened token ids
      emb_ref : (V, E)           embedding table
      h0_ref  : (L, B, H)        initial hidden
      c0_ref  : (L, B, H)        initial cell
      per layer l in [0, L):  w_ih_ref (D_in, 4H), w_hh_ref (H, 4H), b_ref (1, 4H)
      fc_w_ref: (H, O)
      fc_b_ref: (1, O)
    Outputs:
      out_ref : (B, O)
      hT_ref  : (L, B, H)
      cT_ref  : (L, B, H)
    """
    n_in = 4 + 3 * N_LAYERS + 2
    ids_ref, emb_ref, h0_ref, c0_ref = refs[:4]
    fc_w_ref, fc_b_ref = refs[n_in - 2], refs[n_in - 1]
    out_ref, hT_ref, cT_ref = refs[n_in], refs[n_in + 1], refs[n_in + 2]

    TB = ids_ref.shape[0]
    _, B, H = h0_ref.shape
    T = TB // B
    V = emb_ref.shape[0]

    # --- Embedding lookup as one-hot MXU matmul (keeps the gather in-kernel) ---
    ids = ids_ref[...]                                              # (T*B, 1) i32
    onehot = (ids == lax.broadcasted_iota(jnp.int32, (TB, V), 1)
              ).astype(jnp.float32)                                 # (T*B, V)
    x = jnp.dot(onehot, emb_ref[...],
                preferred_element_type=jnp.float32)                 # (T*B, E)

    h = None
    for layer in range(N_LAYERS):
        w_ih_ref, w_hh_ref, b_ref = refs[4 + 3 * layer: 7 + 3 * layer]
        w_hh = w_hh_ref[...]                                        # (H, 4H)

        # Hoisted input->gates matmul + bias for ALL timesteps at once.
        gx = (jnp.dot(x, w_ih_ref[...], preferred_element_type=jnp.float32)
              + b_ref[...])                                         # (T*B, 4H)

        h = h0_ref[layer]                                           # (B, H)
        c = c0_ref[layer]                                           # (B, H)
        ys = []
        for t in range(T):  # fully unrolled: T is small and static
            gates = gx[t * B:(t + 1) * B, :] + jnp.dot(
                h, w_hh, preferred_element_type=jnp.float32)        # (B, 4H)
            sig = jax.nn.sigmoid(gates)   # one EUP pass covers i, f, o
            tnh = jnp.tanh(gates)         # one EUP pass covers g
            i_g = sig[:, 0 * H:1 * H]
            f_g = sig[:, 1 * H:2 * H]
            g_g = tnh[:, 2 * H:3 * H]
            o_g = sig[:, 3 * H:4 * H]
            c = f_g * c + i_g * g_g
            h = o_g * jnp.tanh(c)
            ys.append(h)

        hT_ref[layer] = h
        cT_ref[layer] = c
        if layer < N_LAYERS - 1:
            x = jnp.concatenate(ys, axis=0)                         # (T*B, H)
        # TODO(synk): inter-layer LSTM dropout (p=drop_prob) omitted - eval mode.

    # nn.Dropout(0.3) is identity in eval mode; FC on last timestep of top layer.
    out_ref[...] = (jnp.dot(h, fc_w_ref[...],
                            preferred_element_type=jnp.float32) + fc_b_ref[...])


def _cost_estimate(T, B, V, E, H, L, O):
    flops = 2 * T * B * V * E                        # one-hot embedding matmul
    flops += L * 2 * T * B * max(E, H) * 4 * H       # hoisted x @ W_ih (approx)
    flops += L * T * 2 * B * H * 4 * H               # recurrent h @ W_hh
    flops += 2 * B * H * O                           # FC
    transcendentals = L * T * (2 * B * 4 * H + B * H)
    bytes_accessed = 4 * (V * E
                          + L * ((max(E, H) + H) * 4 * H + 4 * H)
                          + H * O + O
                          + 4 * L * B * H
                          + T * B
                          + B * O)
    return pl.CostEstimate(flops=flops, transcendentals=transcendentals,
                           bytes_accessed=bytes_accessed)


# ------------------------------ parameter setup -------------------------------
def init_params(key):
    keys = jax.random.split(key, 2 + 6 * N_LAYERS)
    k = iter(keys)
    bound = 1.0 / jnp.sqrt(HIDDEN_DIM)

    params = {
        "embedding": jax.random.normal(next(k), (VOCAB_SIZE, EMBEDDING_DIM),
                                       jnp.float32),
        "lstm": [],
    }
    for layer in range(N_LAYERS):
        d_in = EMBEDDING_DIM if layer == 0 else HIDDEN_DIM
        params["lstm"].append({
            "w_ih": jax.random.uniform(next(k), (4 * HIDDEN_DIM, d_in),
                                       jnp.float32, -bound, bound),
            "w_hh": jax.random.uniform(next(k), (4 * HIDDEN_DIM, HIDDEN_DIM),
                                       jnp.float32, -bound, bound),
            "b_ih": jax.random.uniform(next(k), (4 * HIDDEN_DIM,),
                                       jnp.float32, -bound, bound),
            "b_hh": jax.random.uniform(next(k), (4 * HIDDEN_DIM,),
                                       jnp.float32, -bound, bound),
        })
    params["fc_w"] = jax.random.uniform(next(k), (OUTPUT_SIZE, HIDDEN_DIM),
                                        jnp.float32, -bound, bound)
    params["fc_b"] = jax.random.uniform(next(k), (OUTPUT_SIZE,),
                                        jnp.float32, -bound, bound)
    return params


def init_hidden(batch_size):
    z = jnp.zeros((N_LAYERS, batch_size, HIDDEN_DIM), jnp.float32)
    return (z, z)


# --------------------------------- forward -----------------------------------
def toxic_comment_forward(params, x_ids, hidden):
    h0_all, c0_all = hidden                               # (L, B, H) each
    B, T = x_ids.shape
    H = HIDDEN_DIM

    # time-major flattened ids: row t*B + b == token at time t, batch b
    ids_tm = jnp.transpose(x_ids.astype(jnp.int32), (1, 0)).reshape(T * B, 1)

    args = [ids_tm, params["embedding"], h0_all, c0_all]
    for p in params["lstm"]:
        args += [p["w_ih"].T, p["w_hh"].T,
                 (p["b_ih"] + p["b_hh"]).reshape(1, 4 * H)]
    args += [params["fc_w"].T, params["fc_b"].reshape(1, OUTPUT_SIZE)]

    out, hT, cT = pl.pallas_call(
        _fused_forward_kernel,
        out_shape=(jax.ShapeDtypeStruct((B, OUTPUT_SIZE), jnp.float32),
                   jax.ShapeDtypeStruct((N_LAYERS, B, H), jnp.float32),
                   jax.ShapeDtypeStruct((N_LAYERS, B, H), jnp.float32)),
        in_specs=[_VMEM_SPEC] * len(args),
        out_specs=(_VMEM_SPEC, _VMEM_SPEC, _VMEM_SPEC),
        cost_estimate=_cost_estimate(T, B, VOCAB_SIZE, EMBEDDING_DIM, H,
                                     N_LAYERS, OUTPUT_SIZE),
    )(*args)
    return out, (hT, cT)


# ------------------------------ pure-JAX reference ----------------------------
def _reference_forward(params, x_ids, hidden):
    h0_all, c0_all = hidden
    embeds = params["embedding"][x_ids.astype(jnp.int32)]  # (B, T, E)
    x = embeds
    H = HIDDEN_DIM
    h_out, c_out = [], []
    for layer in range(N_LAYERS):
        p = params["lstm"][layer]
        h = h0_all[layer]
        c = c0_all[layer]
        ys = []
        for t in range(x.shape[1]):
            gates = (x[:, t, :] @ p["w_ih"].T + p["b_ih"]
                     + h @ p["w_hh"].T + p["b_hh"])
            i = jax.nn.sigmoid(gates[:, 0 * H:1 * H])
            f = jax.nn.sigmoid(gates[:, 1 * H:2 * H])
            g = jnp.tanh(gates[:, 2 * H:3 * H])
            o = jax.nn.sigmoid(gates[:, 3 * H:4 * H])
            c = f * c + i * g
            h = o * jnp.tanh(c)
            ys.append(h)
        x = jnp.stack(ys, axis=1)
        h_out.append(h)
        c_out.append(c)
    out = x[:, -1, :] @ params["fc_w"].T + params["fc_b"]
    return out, (jnp.stack(h_out), jnp.stack(c_out))


# ----------------------------------- main -------------------------------------
if __name__ == "__main__":
    key = jax.random.PRNGKey(0)
    k_params, k_data = jax.random.split(key)
    params = init_params(k_params)

    x_ids = jax.random.randint(k_data, (BATCH, SEQ_LEN), 0, VOCAB_SIZE,
                               dtype=jnp.int32)
    hidden = init_hidden(BATCH)

    out, (h_n, c_n) = toxic_comment_forward(params, x_ids, hidden)
    jax.block_until_ready(out)
    jax.block_until_ready(h_n)
    jax.block_until_ready(c_n)

    ref_out, (ref_h, ref_c) = _reference_forward(params, x_ids, hidden)
    assert out.shape == (BATCH, OUTPUT_SIZE)
    assert h_n.shape == (N_LAYERS, BATCH, HIDDEN_DIM)
    assert c_n.shape == (N_LAYERS, BATCH, HIDDEN_DIM)
    assert jnp.allclose(out, ref_out, atol=1e-4, rtol=1e-4)
    assert jnp.allclose(h_n, ref_h, atol=1e-4, rtol=1e-4)
    assert jnp.allclose(c_n, ref_c, atol=1e-4, rtol=1e-4)

    print("KERNEL_OK")
</pallas_src>

<mosaic_0001>
module attributes {stable_mosaic.version = 11 : i64} {
  func.func @_fused_forward_kernel(%arg0: memref<16x1xi32, #tpu.memory_space<vmem>>, %arg1: memref<64x32xf32, #tpu.memory_space<vmem>>, %arg2: memref<2x2x32xf32, #tpu.memory_space<vmem>>, %arg3: memref<2x2x32xf32, #tpu.memory_space<vmem>>, %arg4: memref<32x128xf32, #tpu.memory_space<vmem>>, %arg5: memref<32x128xf32, #tpu.memory_space<vmem>>, %arg6: memref<1x128xf32, #tpu.memory_space<vmem>>, %arg7: memref<32x128xf32, #tpu.memory_space<vmem>>, %arg8: memref<32x128xf32, #tpu.memory_space<vmem>>, %arg9: memref<1x128xf32, #tpu.memory_space<vmem>>, %arg10: memref<32x4xf32, #tpu.memory_space<vmem>>, %arg11: memref<1x4xf32, #tpu.memory_space<vmem>>, %arg12: memref<2x4xf32, #tpu.memory_space<vmem>>, %arg13: memref<2x2x32xf32, #tpu.memory_space<vmem>>, %arg14: memref<2x2x32xf32, #tpu.memory_space<vmem>>) attributes {dimension_semantics = [], scalar_prefetch = 0 : i64, scratch_operands = 0 : i64, tpu.core_type = #tpu.core_type<tc>} {
    %c0 = arith.constant 0 : index
    %c0_0 = arith.constant 0 : index
    %0 = vector.load %arg0[%c0, %c0_0] : memref<16x1xi32, #tpu.memory_space<vmem>>, vector<16x1xi32>
    %1 = tpu.iota {dimensions = array<i32: 1>} : vector<16x64xi32>
    %2 = vector.broadcast %0 : vector<16x1xi32> to vector<16x64xi32>
    %3 = arith.cmpi eq, %2, %1 : vector<16x64xi32>
    %4 = arith.extui %3 : vector<16x64xi1> to vector<16x64xi32>
    %5 = arith.sitofp %4 : vector<16x64xi32> to vector<16x64xf32>
    %c0_1 = arith.constant 0 : index
    %c0_2 = arith.constant 0 : index
    %6 = vector.load %arg1[%c0_1, %c0_2] : memref<64x32xf32, #tpu.memory_space<vmem>>, vector<64x32xf32>
    %cst = arith.constant dense<0.000000e+00> : vector<16x32xf32>
    %7 = tpu.matmul %5, %6, %cst {dimension_numbers = #tpu.dot_dimension_numbers<[1], [0], [0], [1], [0, 0, 1, 1], [], []>} : vector<16x64xf32>, vector<64x32xf32>, vector<16x32xf32> -> vector<16x32xf32>
    %c0_3 = arith.constant 0 : index
    %c0_4 = arith.constant 0 : index
    %8 = vector.load %arg5[%c0_3, %c0_4] : memref<32x128xf32, #tpu.memory_space<vmem>>, vector<32x128xf32>
    %c0_5 = arith.constant 0 : index
    %c0_6 = arith.constant 0 : index
    %9 = vector.load %arg4[%c0_5, %c0_6] : memref<32x128xf32, #tpu.memory_space<vmem>>, vector<32x128xf32>
    %cst_7 = arith.constant dense<0.000000e+00> : vector<16x128xf32>
    %10 = tpu.matmul %7, %9, %cst_7 {dimension_numbers = #tpu.dot_dimension_numbers<[1], [0], [0], [1], [0, 0, 1, 1], [], []>} : vector<16x32xf32>, vector<32x128xf32>, vector<16x128xf32> -> vector<16x128xf32>
    %c0_8 = arith.constant 0 : index
    %c0_9 = arith.constant 0 : index
    %11 = vector.load %arg6[%c0_8, %c0_9] : memref<1x128xf32, #tpu.memory_space<vmem>>, vector<1x128xf32>
    %12 = vector.broadcast %11 : vector<1x128xf32> to vector<16x128xf32>
    %13 = arith.addf %10, %12 : vector<16x128xf32>
    %c0_10 = arith.constant 0 : index
    %c0_11 = arith.constant 0 : index
    %c0_12 = arith.constant 0 : index
    %14 = vector.load %arg2[%c0_10, %c0_11, %c0_12] : memref<2x2x32xf32, #tpu.memory_space<vmem>>, vector<1x2x32xf32>
    %15 = vector.shape_cast %14 : vector<1x2x32xf32> to vector<2x32xf32>
    %c0_13 = arith.constant 0 : index
    %c0_14 = arith.constant 0 : index
    %c0_15 = arith.constant 0 : index
    %16 = vector.load %arg3[%c0_13, %c0_14, %c0_15] : memref<2x2x32xf32, #tpu.memory_space<vmem>>, vector<1x2x32xf32>
    %17 = vector.shape_cast %16 : vector<1x2x32xf32> to vector<2x32xf32>
    %18 = vector.extract_strided_slice %13 {offsets = [0, 0], sizes = [2, 128], strides = [1, 1]} : vector<16x128xf32> to vector<2x128xf32>
    %cst_16 = arith.constant dense<0.000000e+00> : vector<2x128xf32>
    %19 = tpu.matmul %15, %8, %cst_16 {dimension_numbers = #tpu.dot_dimension_numbers<[1], [0], [0], [1], [0, 0, 1, 1], [], []>} : vector<2x32xf32>, vector<32x128xf32>, vector<2x128xf32> -> vector<2x128xf32>
    %20 = arith.addf %18, %19 : vector<2x128xf32>
    %21 = arith.negf %20 : vector<2x128xf32>
    %22 = math.exp %21 : vector<2x128xf32>
    %cst_17 = arith.constant 1.000000e+00 : f32
    %23 = vector.broadcast %cst_17 : f32 to vector<2x128xf32>
    %24 = arith.addf %23, %22 : vector<2x128xf32>
    %25 = arith.divf %23, %24 : vector<2x128xf32>
    %26 = math.tanh %20 : vector<2x128xf32>
    %27 = vector.extract_strided_slice %25 {offsets = [0, 0], sizes = [2, 32], strides = [1, 1]} : vector<2x128xf32> to vector<2x32xf32>
    %28 = vector.extract_strided_slice %25 {offsets = [0, 32], sizes = [2, 32], strides = [1, 1]} : vector<2x128xf32> to vector<2x32xf32>
    %29 = vector.extract_strided_slice %26 {offsets = [0, 64], sizes = [2, 32], strides = [1, 1]} : vector<2x128xf32> to vector<2x32xf32>
    %30 = vector.extract_strided_slice %25 {offsets = [0, 96], sizes = [2, 32], strides = [1, 1]} : vector<2x128xf32> to vector<2x32xf32>
    %31 = arith.mulf %28, %17 : vector<2x32xf32>
    %32 = arith.mulf %27, %29 : vector<2x32xf32>
    %33 = arith.addf %31, %32 : vector<2x32xf32>
    %34 = math.tanh %33 : vector<2x32xf32>
    %35 = arith.mulf %30, %34 : vector<2x32xf32>
    %36 = vector.extract_strided_slice %13 {offsets = [2, 0], sizes = [2, 128], strides = [1, 1]} : vector<16x128xf32> to vector<2x128xf32>
    %cst_18 = arith.constant dense<0.000000e+00> : vector<2x128xf32>
    %37 = tpu.matmul %35, %8, %cst_18 {dimension_numbers = #tpu.dot_dimension_numbers<[1], [0], [0], [1], [0, 0, 1, 1], [], []>} : vector<2x32xf32>, vector<32x128xf32>, vector<2x128xf32> -> vector<2x128xf32>
    %38 = arith.addf %36, %37 : vector<2x128xf32>
    %39 = arith.negf %38 : vector<2x128xf32>
    %40 = math.exp %39 : vector<2x128xf32>
    %cst_19 = arith.constant 1.000000e+00 : f32
    %41 = vector.broadcast %cst_19 : f32 to vector<2x128xf32>
    %42 = arith.addf %41, %40 : vector<2x128xf32>
    %43 = arith.divf %41, %42 : vector<2x128xf32>
    %44 = math.tanh %38 : vector<2x128xf32>
    %45 = vector.extract_strided_slice %43 {offsets = [0, 0], sizes = [2, 32], strides = [1, 1]} : vector<2x128xf32> to vector<2x32xf32>
    %46 = vector.extract_strided_slice %43 {offsets = [0, 32], sizes = [2, 32], strides = [1, 1]} : vector<2x128xf32> to vector<2x32xf32>
    %47 = vector.extract_strided_slice %44 {offsets = [0, 64], sizes = [2, 32], strides = [1, 1]} : vector<2x128xf32> to vector<2x32xf32>
    %48 = vector.extract_strided_slice %43 {offsets = [0, 96], sizes = [2, 32], strides = [1, 1]} : vector<2x128xf32> to vector<2x32xf32>
    %49 = arith.mulf %46, %33 : vector<2x32xf32>
    %50 = arith.mulf %45, %47 : vector<2x32xf32>
    %51 = arith.addf %49, %50 : vector<2x32xf32>
    %52 = math.tanh %51 : vector<2x32xf32>
    %53 = arith.mulf %48, %52 : vector<2x32xf32>
    %54 = vector.extract_strided_slice %13 {offsets = [4, 0], sizes = [2, 128], strides = [1, 1]} : vector<16x128xf32> to vector<2x128xf32>
    %cst_20 = arith.constant dense<0.000000e+00> : vector<2x128xf32>
    %55 = tpu.matmul %53, %8, %cst_20 {dimension_numbers = #tpu.dot_dimension_numbers<[1], [0], [0], [1], [0, 0, 1, 1], [], []>} : vector<2x32xf32>, vector<32x128xf32>, vector<2x128xf32> -> vector<2x128xf32>
    %56 = arith.addf %54, %55 : vector<2x128xf32>
    %57 = arith.negf %56 : vector<2x128xf32>
    %58 = math.exp %57 : vector<2x128xf32>
    %cst_21 = arith.constant 1.000000e+00 : f32
    %59 = vector.broadcast %cst_21 : f32 to vector<2x128xf32>
    %60 = arith.addf %59, %58 : vector<2x128xf32>
    %61 = arith.divf %59, %60 : vector<2x128xf32>
    %62 = math.tanh %56 : vector<2x128xf32>
    %63 = vector.extract_strided_slice %61 {offsets = [0, 0], sizes = [2, 32], strides = [1, 1]} : vector<2x128xf32> to vector<2x32xf32>
    %64 = vector.extract_strided_slice %61 {offsets = [0, 32], sizes = [2, 32], strides = [1, 1]} : vector<2x128xf32> to vector<2x32xf32>
    %65 = vector.extract_strided_slice %62 {offsets = [0, 64], sizes = [2, 32], strides = [1, 1]} : vector<2x128xf32> to vector<2x32xf32>
    %66 = vector.extract_strided_slice %61 {offsets = [0, 96], sizes = [2, 32], strides = [1, 1]} : vector<2x128xf32> to vector<2x32xf32>
    %67 = arith.mulf %64, %51 : vector<2x32xf32>
    %68 = arith.mulf %63, %65 : vector<2x32xf32>
    %69 = arith.addf %67, %68 : vector<2x32xf32>
    %70 = math.tanh %69 : vector<2x32xf32>
    %71 = arith.mulf %66, %70 : vector<2x32xf32>
    %72 = vector.extract_strided_slice %13 {offsets = [6, 0], sizes = [2, 128], strides = [1, 1]} : vector<16x128xf32> to vector<2x128xf32>
    %cst_22 = arith.constant dense<0.000000e+00> : vector<2x128xf32>
    %73 = tpu.matmul %71, %8, %cst_22 {dimension_numbers = #tpu.dot_dimension_numbers<[1], [0], [0], [1], [0, 0, 1, 1], [], []>} : vector<2x32xf32>, vector<32x128xf32>, vector<2x128xf32> -> vector<2x128xf32>
    %74 = arith.addf %72, %73 : vector<2x128xf32>
    %75 = arith.negf %74 : vector<2x128xf32>
    %76 = math.exp %75 : vector<2x128xf32>
    %cst_23 = arith.constant 1.000000e+00 : f32
    %77 = vector.broadcast %cst_23 : f32 to vector<2x128xf32>
    %78 = arith.addf %77, %76 : vector<2x128xf32>
    %79 = arith.divf %77, %78 : vector<2x128xf32>
    %80 = math.tanh %74 : vector<2x128xf32>
    %81 = vector.extract_strided_slice %79 {offsets = [0, 0], sizes = [2, 32], strides = [1, 1]} : vector<2x128xf32> to vector<2x32xf32>
    %82 = vector.extract_strided_slice %79 {offsets = [0, 32], sizes = [2, 32], strides = [1, 1]} : vector<2x128xf32> to vector<2x32xf32>
    %83 = vector.extract_strided_slice %80 {offsets = [0, 64], sizes = [2, 32], strides = [1, 1]} : vector<2x128xf32> to vector<2x32xf32>
    %84 = vector.extract_strided_slice %79 {offsets = [0, 96], sizes = [2, 32], strides = [1, 1]} : vector<2x128xf32> to vector<2x32xf32>
    %85 = arith.mulf %82, %69 : vector<2x32xf32>
    %86 = arith.mulf %81, %83 : vector<2x32xf32>
    %87 = arith.addf %85, %86 : vector<2x32xf32>
    %88 = math.tanh %87 : vector<2x32xf32>
    %89 = arith.mulf %84, %88 : vector<2x32xf32>
    %90 = vector.extract_strided_slice %13 {offsets = [8, 0], sizes = [2, 128], strides = [1, 1]} : vector<16x128xf32> to vector<2x128xf32>
    %cst_24 = arith.constant dense<0.000000e+00> : vector<2x128xf32>
    %91 = tpu.matmul %89, %8, %cst_24 {dimension_numbers = #tpu.dot_dimension_numbers<[1], [0], [0], [1], [0, 0, 1, 1], [], []>} : vector<2x32xf32>, vector<32x128xf32>, vector<2x128xf32> -> vector<2x128xf32>
    %92 = arith.addf %90, %91 : vector<2x128xf32>
    %93 = arith.negf %92 : vector<2x128xf32>
    %94 = math.exp %93 : vector<2x128xf32>
    %cst_25 = arith.constant 1.000000e+00 : f32
    %95 = vector.broadcast %cst_25 : f32 to vector<2x128xf32>
    %96 = arith.addf %95, %94 : vector<2x128xf32>
    %97 = arith.divf %95, %96 : vector<2x128xf32>
    %98 = math.tanh %92 : vector<2x128xf32>
    %99 = vector.extract_strided_slice %97 {offsets = [0, 0], sizes = [2, 32], strides = [1, 1]} : vector<2x128xf32> to vector<2x32xf32>
    %100 = vector.extract_strided_slice %97 {offsets = [0, 32], sizes = [2, 32], strides = [1, 1]} : vector<2x128xf32> to vector<2x32xf32>
    %101 = vector.extract_strided_slice %98 {offsets = [0, 64], sizes = [2, 32], strides = [1, 1]} : vector<2x128xf32> to vector<2x32xf32>
    %102 = vector.extract_strided_slice %97 {offsets = [0, 96], sizes = [2, 32], strides = [1, 1]} : vector<2x128xf32> to vector<2x32xf32>
    %103 = arith.mulf %100, %87 : vector<2x32xf32>
    %104 = arith.mulf %99, %101 : vector<2x32xf32>
    %105 = arith.addf %103, %104 : vector<2x32xf32>
    %106 = math.tanh %105 : vector<2x32xf32>
    %107 = arith.mulf %102, %106 : vector<2x32xf32>
    %108 = vector.extract_strided_slice %13 {offsets = [10, 0], sizes = [2, 128], strides = [1, 1]} : vector<16x128xf32> to vector<2x128xf32>
    %cst_26 = arith.constant dense<0.000000e+00> : vector<2x128xf32>
    %109 = tpu.matmul %107, %8, %cst_26 {dimension_numbers = #tpu.dot_dimension_numbers<[1], [0], [0], [1], [0, 0, 1, 1], [], []>} : vector<2x32xf32>, vector<32x128xf32>, vector<2x128xf32> -> vector<2x128xf32>
    %110 = arith.addf %108, %109 : vector<2x128xf32>
    %111 = arith.negf %110 : vector<2x128xf32>
    %112 = math.exp %111 : vector<2x128xf32>
    %cst_27 = arith.constant 1.000000e+00 : f32
    %113 = vector.broadcast %cst_27 : f32 to vector<2x128xf32>
    %114 = arith.addf %113, %112 : vector<2x128xf32>
    %115 = arith.divf %113, %114 : vector<2x128xf32>
    %116 = math.tanh %110 : vector<2x128xf32>
    %117 = vector.extract_strided_slice %115 {offsets = [0, 0], sizes = [2, 32], strides = [1, 1]} : vector<2x128xf32> to vector<2x32xf32>
    %118 = vector.extract_strided_slice %115 {offsets = [0, 32], sizes = [2, 32], strides = [1, 1]} : vector<2x128xf32> to vector<2x32xf32>
    %119 = vector.extract_strided_slice %116 {offsets = [0, 64], sizes = [2, 32], strides = [1, 1]} : vector<2x128xf32> to vector<2x32xf32>
    %120 = vector.extract_strided_slice %115 {offsets = [0, 96], sizes = [2, 32], strides = [1, 1]} : vector<2x128xf32> to vector<2x32xf32>
    %121 = arith.mulf %118, %105 : vector<2x32xf32>
    %122 = arith.mulf %117, %119 : vector<2x32xf32>
    %123 = arith.addf %121, %122 : vector<2x32xf32>
    %124 = math.tanh %123 : vector<2x32xf32>
    %125 = arith.mulf %120, %124 : vector<2x32xf32>
    %126 = vector.extract_strided_slice %13 {offsets = [12, 0], sizes = [2, 128], strides = [1, 1]} : vector<16x128xf32> to vector<2x128xf32>
    %cst_28 = arith.constant dense<0.000000e+00> : vector<2x128xf32>
    %127 = tpu.matmul %125, %8, %cst_28 {dimension_numbers = #tpu.dot_dimension_numbers<[1], [0], [0], [1], [0, 0, 1, 1], [], []>} : vector<2x32xf32>, vector<32x128xf32>, vector<2x128xf32> -> vector<2x128xf32>
    %128 = arith.addf %126, %127 : vector<2x128xf32>
    %129 = arith.negf %128 : vector<2x128xf32>
    %130 = math.exp %129 : vector<2x128xf32>
    %cst_29 = arith.constant 1.000000e+00 : f32
    %131 = vector.broadcast %cst_29 : f32 to vector<2x128xf32>
    %132 = arith.addf %131, %130 : vector<2x128xf32>
    %133 = arith.divf %131, %132 : vector<2x128xf32>
    %134 = math.tanh %128 : vector<2x128xf32>
    %135 = vector.extract_strided_slice %133 {offsets = [0, 0], sizes = [2, 32], strides = [1, 1]} : vector<2x128xf32> to vector<2x32xf32>
    %136 = vector.extract_strided_slice %133 {offsets = [0, 32], sizes = [2, 32], strides = [1, 1]} : vector<2x128xf32> to vector<2x32xf32>
    %137 = vector.extract_strided_slice %134 {offsets = [0, 64], sizes = [2, 32], strides = [1, 1]} : vector<2x128xf32> to vector<2x32xf32>
    %138 = vector.extract_strided_slice %133 {offsets = [0, 96], sizes = [2, 32], strides = [1, 1]} : vector<2x128xf32> to vector<2x32xf32>
    %139 = arith.mulf %136, %123 : vector<2x32xf32>
    %140 = arith.mulf %135, %137 : vector<2x32xf32>
    %141 = arith.addf %139, %140 : vector<2x32xf32>
    %142 = math.tanh %141 : vector<2x32xf32>
    %143 = arith.mulf %138, %142 : vector<2x32xf32>
    %144 = vector.extract_strided_slice %13 {offsets = [14, 0], sizes = [2, 128], strides = [1, 1]} : vector<16x128xf32> to vector<2x128xf32>
    %cst_30 = arith.constant dense<0.000000e+00> : vector<2x128xf32>
    %145 = tpu.matmul %143, %8, %cst_30 {dimension_numbers = #tpu.dot_dimension_numbers<[1], [0], [0], [1], [0, 0, 1, 1], [], []>} : vector<2x32xf32>, vector<32x128xf32>, vector<2x128xf32> -> vector<2x128xf32>
    %146 = arith.addf %144, %145 : vector<2x128xf32>
    %147 = arith.negf %146 : vector<2x128xf32>
    %148 = math.exp %147 : vector<2x128xf32>
    %cst_31 = arith.constant 1.000000e+00 : f32
    %149 = vector.broadcast %cst_31 : f32 to vector<2x128xf32>
    %150 = arith.addf %149, %148 : vector<2x128xf32>
    %151 = arith.divf %149, %150 : vector<2x128xf32>
    %152 = math.tanh %146 : vector<2x128xf32>
    %153 = vector.extract_strided_slice %151 {offsets = [0, 0], sizes = [2, 32], strides = [1, 1]} : vector<2x128xf32> to vector<2x32xf32>
    %154 = vector.extract_strided_slice %151 {offsets = [0, 32], sizes = [2, 32], strides = [1, 1]} : vector<2x128xf32> to vector<2x32xf32>
    %155 = vector.extract_strided_slice %152 {offsets = [0, 64], sizes = [2, 32], strides = [1, 1]} : vector<2x128xf32> to vector<2x32xf32>
    %156 = vector.extract_strided_slice %151 {offsets = [0, 96], sizes = [2, 32], strides = [1, 1]} : vector<2x128xf32> to vector<2x32xf32>
    %157 = arith.mulf %154, %141 : vector<2x32xf32>
    %158 = arith.mulf %153, %155 : vector<2x32xf32>
    %159 = arith.addf %157, %158 : vector<2x32xf32>
    %160 = math.tanh %159 : vector<2x32xf32>
    %161 = arith.mulf %156, %160 : vector<2x32xf32>
    %c0_32 = arith.constant 0 : index
    %c0_33 = arith.constant 0 : index
    %c0_34 = arith.constant 0 : index
    %162 = vector.load %arg13[%c0_32, %c0_33, %c0_34] : memref<2x2x32xf32, #tpu.memory_space<vmem>>, vector<1x2x32xf32>
    %163 = vector.shape_cast %162 : vector<1x2x32xf32> to vector<2x32xf32>
    %164 = vector.shape_cast %161 : vector<2x32xf32> to vector<1x2x32xf32>
    tpu.vector_store %arg13[%c0_32, %c0_33, %c0_34], %164 {strides = array<i32>} : memref<2x2x32xf32, #tpu.memory_space<vmem>>, vector<1x2x32xf32>,
    %c0_35 = arith.constant 0 : index
    %c0_36 = arith.constant 0 : index
    %c0_37 = arith.constant 0 : index
    %165 = vector.load %arg14[%c0_35, %c0_36, %c0_37] : memref<2x2x32xf32, #tpu.memory_space<vmem>>, vector<1x2x32xf32>
    %166 = vector.shape_cast %165 : vector<1x2x32xf32> to vector<2x32xf32>
    %167 = vector.shape_cast %159 : vector<2x32xf32> to vector<1x2x32xf32>
    tpu.vector_store %arg14[%c0_35, %c0_36, %c0_37], %167 {strides = array<i32>} : memref<2x2x32xf32, #tpu.memory_space<vmem>>, vector<1x2x32xf32>,
    %168 = tpu.concatenate %35, %53, %71, %89, %107, %125, %143, %161 in 0 : vector<2x32xf32>, vector<2x32xf32>, vector<2x32xf32>, vector<2x32xf32>, vector<2x32xf32>, vector<2x32xf32>, vector<2x32xf32>, vector<2x32xf32> -> vector<16x32xf32>
    %c0_38 = arith.constant 0 : index
    %c0_39 = arith.constant 0 : index
    %169 = vector.load %arg8[%c0_38, %c0_39] : memref<32x128xf32, #tpu.memory_space<vmem>>, vector<32x128xf32>
    %c0_40 = arith.constant 0 : index
    %c0_41 = arith.constant 0 : index
    %170 = vector.load %arg7[%c0_40, %c0_41] : memref<32x128xf32, #tpu.memory_space<vmem>>, vector<32x128xf32>
    %cst_42 = arith.constant dense<0.000000e+00> : vector<16x128xf32>
    %171 = tpu.matmul %168, %170, %cst_42 {dimension_numbers = #tpu.dot_dimension_numbers<[1], [0], [0], [1], [0, 0, 1, 1], [], []>} : vector<16x32xf32>, vector<32x128xf32>, vector<16x128xf32> -> vector<16x128xf32>
    %c0_43 = arith.constant 0 : index
    %c0_44 = arith.constant 0 : index
    %172 = vector.load %arg9[%c0_43, %c0_44] : memref<1x128xf32, #tpu.memory_space<vmem>>, vector<1x128xf32>
    %173 = vector.broadcast %172 : vector<1x128xf32> to vector<16x128xf32>
    %174 = arith.addf %171, %173 : vector<16x128xf32>
    %c1 = arith.constant 1 : index
    %c0_45 = arith.constant 0 : index
    %c0_46 = arith.constant 0 : index
    %175 = vector.load %arg2[%c1, %c0_45, %c0_46] : memref<2x2x32xf32, #tpu.memory_space<vmem>>, vector<1x2x32xf32>
    %176 = vector.shape_cast %175 : vector<1x2x32xf32> to vector<2x32xf32>
    %c1_47 = arith.constant 1 : index
    %c0_48 = arith.constant 0 : index
    %c0_49 = arith.constant 0 : index
    %177 = vector.load %arg3[%c1_47, %c0_48, %c0_49] : memref<2x2x32xf32, #tpu.memory_space<vmem>>, vector<1x2x32xf32>
    %178 = vector.shape_cast %177 : vector<1x2x32xf32> to vector<2x32xf32>
    %179 = vector.extract_strided_slice %174 {offsets = [0, 0], sizes = [2, 128], strides = [1, 1]} : vector<16x128xf32> to vector<2x128xf32>
    %cst_50 = arith.constant dense<0.000000e+00> : vector<2x128xf32>
    %180 = tpu.matmul %176, %169, %cst_50 {dimension_numbers = #tpu.dot_dimension_numbers<[1], [0], [0], [1], [0, 0, 1, 1], [], []>} : vector<2x32xf32>, vector<32x128xf32>, vector<2x128xf32> -> vector<2x128xf32>
    %181 = arith.addf %179, %180 : vector<2x128xf32>
    %182 = arith.negf %181 : vector<2x128xf32>
    %183 = math.exp %182 : vector<2x128xf32>
    %cst_51 = arith.constant 1.000000e+00 : f32
    %184 = vector.broadcast %cst_51 : f32 to vector<2x128xf32>
    %185 = arith.addf %184, %183 : vector<2x128xf32>
    %186 = arith.divf %184, %185 : vector<2x128xf32>
    %187 = math.tanh %181 : vector<2x128xf32>
    %188 = vector.extract_strided_slice %186 {offsets = [0, 0], sizes = [2, 32], strides = [1, 1]} : vector<2x128xf32> to vector<2x32xf32>
    %189 = vector.extract_strided_slice %186 {offsets = [0, 32], sizes = [2, 32], strides = [1, 1]} : vector<2x128xf32> to vector<2x32xf32>
    %190 = vector.extract_strided_slice %187 {offsets = [0, 64], sizes = [2, 32], strides = [1, 1]} : vector<2x128xf32> to vector<2x32xf32>
    %191 = vector.extract_strided_slice %186 {offsets = [0, 96], sizes = [2, 32], strides = [1, 1]} : vector<2x128xf32> to vector<2x32xf32>
    %192 = arith.mulf %189, %178 : vector<2x32xf32>
    %193 = arith.mulf %188, %190 : vector<2x32xf32>
    %194 = arith.addf %192, %193 : vector<2x32xf32>
    %195 = math.tanh %194 : vector<2x32xf32>
    %196 = arith.mulf %191, %195 : vector<2x32xf32>
    %197 = vector.extract_strided_slice %174 {offsets = [2, 0], sizes = [2, 128], strides = [1, 1]} : vector<16x128xf32> to vector<2x128xf32>
    %cst_52 = arith.constant dense<0.000000e+00> : vector<2x128xf32>
    %198 = tpu.matmul %196, %169, %cst_52 {dimension_numbers = #tpu.dot_dimension_numbers<[1], [0], [0], [1], [0, 0, 1, 1], [], []>} : vector<2x32xf32>, vector<32x128xf32>, vector<2x128xf32> -> vector<2x128xf32>
    %199 = arith.addf %197, %198 : vector<2x128xf32>
    %200 = arith.negf %199 : vector<2x128xf32>
    %201 = math.exp %200 : vector<2x128xf32>
    %cst_53 = arith.constant 1.000000e+00 : f32
    %202 = vector.broadcast %cst_53 : f32 to vector<2x128xf32>
    %203 = arith.addf %202, %201 : vector<2x128xf32>
    %204 = arith.divf %202, %203 : vector<2x128xf32>
    %205 = math.tanh %199 : vector<2x128xf32>
    %206 = vector.extract_strided_slice %204 {offsets = [0, 0], sizes = [2, 32], strides = [1, 1]} : vector<2x128xf32> to vector<2x32xf32>
    %207 = vector.extract_strided_slice %204 {offsets = [0, 32], sizes = [2, 32], strides = [1, 1]} : vector<2x128xf32> to vector<2x32xf32>
    %208 = vector.extract_strided_slice %205 {offsets = [0, 64], sizes = [2, 32], strides = [1, 1]} : vector<2x128xf32> to vector<2x32xf32>
    %209 = vector.extract_strided_slice %204 {offsets = [0, 96], sizes = [2, 32], strides = [1, 1]} : vector<2x128xf32> to vector<2x32xf32>
    %210 = arith.mulf %207, %194 : vector<2x32xf32>
    %211 = arith.mulf %206, %208 : vector<2x32xf32>
    %212 = arith.addf %210, %211 : vector<2x32xf32>
    %213 = math.tanh %212 : vector<2x32xf32>
    %214 = arith.mulf %209, %213 : vector<2x32xf32>
    %215 = vector.extract_strided_slice %174 {offsets = [4, 0], sizes = [2, 128], strides = [1, 1]} : vector<16x128xf32> to vector<2x128xf32>
    %cst_54 = arith.constant dense<0.000000e+00> : vector<2x128xf32>
    %216 = tpu.matmul %214, %169, %cst_54 {dimension_numbers = #tpu.dot_dimension_numbers<[1], [0], [0], [1], [0, 0, 1, 1], [], []>} : vector<2x32xf32>, vector<32x128xf32>, vector<2x128xf32> -> vector<2x128xf32>
    %217 = arith.addf %215, %216 : vector<2x128xf32>
    %218 = arith.negf %217 : vector<2x128xf32>
    %219 = math.exp %218 : vector<2x128xf32>
    %cst_55 = arith.constant 1.000000e+00 : f32
    %220 = vector.broadcast %cst_55 : f32 to vector<2x128xf32>
    %221 = arith.addf %220, %219 : vector<2x128xf32>
    %222 = arith.divf %220, %221 : vector<2x128xf32>
    %223 = math.tanh %217 : vector<2x128xf32>
    %224 = vector.extract_strided_slice %222 {offsets = [0, 0], sizes = [2, 32], strides = [1, 1]} : vector<2x128xf32> to vector<2x32xf32>
    %225 = vector.extract_strided_slice %222 {offsets = [0, 32], sizes = [2, 32], strides = [1, 1]} : vector<2x128xf32> to vector<2x32xf32>
    %226 = vector.extract_strided_slice %223 {offsets = [0, 64], sizes = [2, 32], strides = [1, 1]} : vector<2x128xf32> to vector<2x32xf32>
    %227 = vector.extract_strided_slice %222 {offsets = [0, 96], sizes = [2, 32], strides = [1, 1]} : vector<2x128xf32> to vector<2x32xf32>
    %228 = arith.mulf %225, %212 : vector<2x32xf32>
    %229 = arith.mulf %224, %226 : vector<2x32xf32>
    %230 = arith.addf %228, %229 : vector<2x32xf32>
    %231 = math.tanh %230 : vector<2x32xf32>
    %232 = arith.mulf %227, %231 : vector<2x32xf32>
    %233 = vector.extract_strided_slice %174 {offsets = [6, 0], sizes = [2, 128], strides = [1, 1]} : vector<16x128xf32> to vector<2x128xf32>
    %cst_56 = arith.constant dense<0.000000e+00> : vector<2x128xf32>
    %234 = tpu.matmul %232, %169, %cst_56 {dimension_numbers = #tpu.dot_dimension_numbers<[1], [0], [0], [1], [0, 0, 1, 1], [], []>} : vector<2x32xf32>, vector<32x128xf32>, vector<2x128xf32> -> vector<2x128xf32>
    %235 = arith.addf %233, %234 : vector<2x128xf32>
    %236 = arith.negf %235 : vector<2x128xf32>
    %237 = math.exp %236 : vector<2x128xf32>
    %cst_57 = arith.constant 1.000000e+00 : f32
    %238 = vector.broadcast %cst_57 : f32 to vector<2x128xf32>
    %239 = arith.addf %238, %237 : vector<2x128xf32>
    %240 = arith.divf %238, %239 : vector<2x128xf32>
    %241 = math.tanh %235 : vector<2x128xf32>
    %242 = vector.extract_strided_slice %240 {offsets = [0, 0], sizes = [2, 32], strides = [1, 1]} : vector<2x128xf32> to vector<2x32xf32>
    %243 = vector.extract_strided_slice %240 {offsets = [0, 32], sizes = [2, 32], strides = [1, 1]} : vector<2x128xf32> to vector<2x32xf32>
    %244 = vector.extract_strided_slice %241 {offsets = [0, 64], sizes = [2, 32], strides = [1, 1]} : vector<2x128xf32> to vector<2x32xf32>
    %245 = vector.extract_strided_slice %240 {offsets = [0, 96], sizes = [2, 32], strides = [1, 1]} : vector<2x128xf32> to vector<2x32xf32>
    %246 = arith.mulf %243, %230 : vector<2x32xf32>
    %247 = arith.mulf %242, %244 : vector<2x32xf32>
    %248 = arith.addf %246, %247 : vector<2x32xf32>
    %249 = math.tanh %248 : vector<2x32xf32>
    %250 = arith.mulf %245, %249 : vector<2x32xf32>
    %251 = vector.extract_strided_slice %174 {offsets = [8, 0], sizes = [2, 128], strides = [1, 1]} : vector<16x128xf32> to vector<2x128xf32>
    %cst_58 = arith.constant dense<0.000000e+00> : vector<2x128xf32>
    %252 = tpu.matmul %250, %169, %cst_58 {dimension_numbers = #tpu.dot_dimension_numbers<[1], [0], [0], [1], [0, 0, 1, 1], [], []>} : vector<2x32xf32>, vector<32x128xf32>, vector<2x128xf32> -> vector<2x128xf32>
    %253 = arith.addf %251, %252 : vector<2x128xf32>
    %254 = arith.negf %253 : vector<2x128xf32>
    %255 = math.exp %254 : vector<2x128xf32>
    %cst_59 = arith.constant 1.000000e+00 : f32
    %256 = vector.broadcast %cst_59 : f32 to vector<2x128xf32>
    %257 = arith.addf %256, %255 : vector<2x128xf32>
    %258 = arith.divf %256, %257 : vector<2x128xf32>
    %259 = math.tanh %253 : vector<2x128xf32>
    %260 = vector.extract_strided_slice %258 {offsets = [0, 0], sizes = [2, 32], strides = [1, 1]} : vector<2x128xf32> to vector<2x32xf32>
    %261 = vector.extract_strided_slice %258 {offsets = [0, 32], sizes = [2, 32], strides = [1, 1]} : vector<2x128xf32> to vector<2x32xf32>
    %262 = vector.extract_strided_slice %259 {offsets = [0, 64], sizes = [2, 32], strides = [1, 1]} : vector<2x128xf32> to vector<2x32xf32>
    %263 = vector.extract_strided_slice %258 {offsets = [0, 96], sizes = [2, 32], strides = [1, 1]} : vector<2x128xf32> to vector<2x32xf32>
    %264 = arith.mulf %261, %248 : vector<2x32xf32>
    %265 = arith.mulf %260, %262 : vector<2x32xf32>
    %266 = arith.addf %264, %265 : vector<2x32xf32>
    %267 = math.tanh %266 : vector<2x32xf32>
    %268 = arith.mulf %263, %267 : vector<2x32xf32>
    %269 = vector.extract_strided_slice %174 {offsets = [10, 0], sizes = [2, 128], strides = [1, 1]} : vector<16x128xf32> to vector<2x128xf32>
    %cst_60 = arith.constant dense<0.000000e+00> : vector<2x128xf32>
    %270 = tpu.matmul %268, %169, %cst_60 {dimension_numbers = #tpu.dot_dimension_numbers<[1], [0], [0], [1], [0, 0, 1, 1], [], []>} : vector<2x32xf32>, vector<32x128xf32>, vector<2x128xf32> -> vector<2x128xf32>
    %271 = arith.addf %269, %270 : vector<2x128xf32>
    %272 = arith.negf %271 : vector<2x128xf32>
    %273 = math.exp %272 : vector<2x128xf32>
    %cst_61 = arith.constant 1.000000e+00 : f32
    %274 = vector.broadcast %cst_61 : f32 to vector<2x128xf32>
    %275 = arith.addf %274, %273 : vector<2x128xf32>
    %276 = arith.divf %274, %275 : vector<2x128xf32>
    %277 = math.tanh %271 : vector<2x128xf32>
    %278 = vector.extract_strided_slice %276 {offsets = [0, 0], sizes = [2, 32], strides = [1, 1]} : vector<2x128xf32> to vector<2x32xf32>
    %279 = vector.extract_strided_slice %276 {offsets = [0, 32], sizes = [2, 32], strides = [1, 1]} : vector<2x128xf32> to vector<2x32xf32>
    %280 = vector.extract_strided_slice %277 {offsets = [0, 64], sizes = [2, 32], strides = [1, 1]} : vector<2x128xf32> to vector<2x32xf32>
    %281 = vector.extract_strided_slice %276 {offsets = [0, 96], sizes = [2, 32], strides = [1, 1]} : vector<2x128xf32> to vector<2x32xf32>
    %282 = arith.mulf %279, %266 : vector<2x32xf32>
    %283 = arith.mulf %278, %280 : vector<2x32xf32>
    %284 = arith.addf %282, %283 : vector<2x32xf32>
    %285 = math.tanh %284 : vector<2x32xf32>
    %286 = arith.mulf %281, %285 : vector<2x32xf32>
    %287 = vector.extract_strided_slice %174 {offsets = [12, 0], sizes = [2, 128], strides = [1, 1]} : vector<16x128xf32> to vector<2x128xf32>
    %cst_62 = arith.constant dense<0.000000e+00> : vector<2x128xf32>
    %288 = tpu.matmul %286, %169, %cst_62 {dimension_numbers = #tpu.dot_dimension_numbers<[1], [0], [0], [1], [0, 0, 1, 1], [], []>} : vector<2x32xf32>, vector<32x128xf32>, vector<2x128xf32> -> vector<2x128xf32>
    %289 = arith.addf %287, %288 : vector<2x128xf32>
    %290 = arith.negf %289 : vector<2x128xf32>
    %291 = math.exp %290 : vector<2x128xf32>
    %cst_63 = arith.constant 1.000000e+00 : f32
    %292 = vector.broadcast %cst_63 : f32 to vector<2x128xf32>
    %293 = arith.addf %292, %291 : vector<2x128xf32>
    %294 = arith.divf %292, %293 : vector<2x128xf32>
    %295 = math.tanh %289 : vector<2x128xf32>
    %296 = vector.extract_strided_slice %294 {offsets = [0, 0], sizes = [2, 32], strides = [1, 1]} : vector<2x128xf32> to vector<2x32xf32>
    %297 = vector.extract_strided_slice %294 {offsets = [0, 32], sizes = [2, 32], strides = [1, 1]} : vector<2x128xf32> to vector<2x32xf32>
    %298 = vector.extract_strided_slice %295 {offsets = [0, 64], sizes = [2, 32], strides = [1, 1]} : vector<2x128xf32> to vector<2x32xf32>
    %299 = vector.extract_strided_slice %294 {offsets = [0, 96], sizes = [2, 32], strides = [1, 1]} : vector<2x128xf32> to vector<2x32xf32>
    %300 = arith.mulf %297, %284 : vector<2x32xf32>
    %301 = arith.mulf %296, %298 : vector<2x32xf32>
    %302 = arith.addf %300, %301 : vector<2x32xf32>
    %303 = math.tanh %302 : vector<2x32xf32>
    %304 = arith.mulf %299, %303 : vector<2x32xf32>
    %305 = vector.extract_strided_slice %174 {offsets = [14, 0], sizes = [2, 128], strides = [1, 1]} : vector<16x128xf32> to vector<2x128xf32>
    %cst_64 = arith.constant dense<0.000000e+00> : vector<2x128xf32>
    %306 = tpu.matmul %304, %169, %cst_64 {dimension_numbers = #tpu.dot_dimension_numbers<[1], [0], [0], [1], [0, 0, 1, 1], [], []>} : vector<2x32xf32>, vector<32x128xf32>, vector<2x128xf32> -> vector<2x128xf32>
    %307 = arith.addf %305, %306 : vector<2x128xf32>
    %308 = arith.negf %307 : vector<2x128xf32>
    %309 = math.exp %308 : vector<2x128xf32>
    %cst_65 = arith.constant 1.000000e+00 : f32
    %310 = vector.broadcast %cst_65 : f32 to vector<2x128xf32>
    %311 = arith.addf %310, %309 : vector<2x128xf32>
    %312 = arith.divf %310, %311 : vector<2x128xf32>
    %313 = math.tanh %307 : vector<2x128xf32>
    %314 = vector.extract_strided_slice %312 {offsets = [0, 0], sizes = [2, 32], strides = [1, 1]} : vector<2x128xf32> to vector<2x32xf32>
    %315 = vector.extract_strided_slice %312 {offsets = [0, 32], sizes = [2, 32], strides = [1, 1]} : vector<2x128xf32> to vector<2x32xf32>
    %316 = vector.extract_strided_slice %313 {offsets = [0, 64], sizes = [2, 32], strides = [1, 1]} : vector<2x128xf32> to vector<2x32xf32>
    %317 = vector.extract_strided_slice %312 {offsets = [0, 96], sizes = [2, 32], strides = [1, 1]} : vector<2x128xf32> to vector<2x32xf32>
    %318 = arith.mulf %315, %302 : vector<2x32xf32>
    %319 = arith.mulf %314, %316 : vector<2x32xf32>
    %320 = arith.addf %318, %319 : vector<2x32xf32>
    %321 = math.tanh %320 : vector<2x32xf32>
    %322 = arith.mulf %317, %321 : vector<2x32xf32>
    %c1_66 = arith.constant 1 : index
    %c0_67 = arith.constant 0 : index
    %c0_68 = arith.constant 0 : index
    %323 = vector.load %arg13[%c1_66, %c0_67, %c0_68] : memref<2x2x32xf32, #tpu.memory_space<vmem>>, vector<1x2x32xf32>
    %324 = vector.shape_cast %323 : vector<1x2x32xf32> to vector<2x32xf32>
    %325 = vector.shape_cast %322 : vector<2x32xf32> to vector<1x2x32xf32>
    tpu.vector_store %arg13[%c1_66, %c0_67, %c0_68], %325 {strides = array<i32>} : memref<2x2x32xf32, #tpu.memory_space<vmem>>, vector<1x2x32xf32>,
    %c1_69 = arith.constant 1 : index
    %c0_70 = arith.constant 0 : index
    %c0_71 = arith.constant 0 : index
    %326 = vector.load %arg14[%c1_69, %c0_70, %c0_71] : memref<2x2x32xf32, #tpu.memory_space<vmem>>, vector<1x2x32xf32>
    %327 = vector.shape_cast %326 : vector<1x2x32xf32> to vector<2x32xf32>
    %328 = vector.shape_cast %320 : vector<2x32xf32> to vector<1x2x32xf32>
    tpu.vector_store %arg14[%c1_69, %c0_70, %c0_71], %328 {strides = array<i32>} : memref<2x2x32xf32, #tpu.memory_space<vmem>>, vector<1x2x32xf32>,
    %c0_72 = arith.constant 0 : index
    %c0_73 = arith.constant 0 : index
    %329 = vector.load %arg10[%c0_72, %c0_73] : memref<32x4xf32, #tpu.memory_space<vmem>>, vector<32x4xf32>
    %cst_74 = arith.constant dense<0.000000e+00> : vector<2x4xf32>
    %330 = tpu.matmul %322, %329, %cst_74 {dimension_numbers = #tpu.dot_dimension_numbers<[1], [0], [0], [1], [0, 0, 1, 1], [], []>} : vector<2x32xf32>, vector<32x4xf32>, vector<2x4xf32> -> vector<2x4xf32>
    %c0_75 = arith.constant 0 : index
    %c0_76 = arith.constant 0 : index
    %331 = vector.load %arg11[%c0_75, %c0_76] : memref<1x4xf32, #tpu.memory_space<vmem>>, vector<1x4xf32>
    %332 = vector.broadcast %331 : vector<1x4xf32> to vector<2x4xf32>
    %333 = arith.addf %330, %332 : vector<2x4xf32>
    %c0_77 = arith.constant 0 : index
    %c0_78 = arith.constant 0 : index
    %334 = vector.load %arg12[%c0_77, %c0_78] : memref<2x4xf32, #tpu.memory_space<vmem>>, vector<2x4xf32>
    tpu.vector_store %arg12[%c0_77, %c0_78], %333 {strides = array<i32>} : memref<2x4xf32, #tpu.memory_space<vmem>>, vector<2x4xf32>,
    return
  }
}

</mosaic_0001>

<llo_original>
// kernel: tpu_custom_call.1
$region0: #{tpu_custom_call.1}
  #allocation0 [shape = 'u32[]', space=smem, size = 0x4, offset = 0x4, fixed_abs, tag = 'smem constant byte address 0x4 - core index']
  #allocation1 [shape = 'u32[144,128]{1,0:T(1,128)}', space=vmem, size = 0x12000, scoped, tag = 'internal scratch']
  %s0 = inlined_call_operand.vmem [shape: s32[16,1], index: 0, kind: input, shape index: {}]
  %s1 = inlined_call_operand.vmem [shape: f32[64,32], index: 1, kind: input, shape index: {}]
  %s2 = inlined_call_operand.hbm [shape: f32[2,2,32], index: 2, kind: input, shape index: {}]
  %s3 = inlined_call_operand.hbm [shape: f32[2,2,32], index: 3, kind: input, shape index: {}]
  %s4 = inlined_call_operand.vmem [shape: f32[32,128], index: 4, kind: input, shape index: {}]
  %s5 = inlined_call_operand.vmem [shape: f32[32,128], index: 5, kind: input, shape index: {}]
  %s6 = inlined_call_operand.vmem [shape: f32[1,128], index: 6, kind: input, shape index: {}]
  %s7 = inlined_call_operand.vmem [shape: f32[32,128], index: 7, kind: input, shape index: {}]
  %s8 = inlined_call_operand.vmem [shape: f32[32,128], index: 8, kind: input, shape index: {}]
  %s9 = inlined_call_operand.vmem [shape: f32[1,128], index: 9, kind: input, shape index: {}]
  %s10 = inlined_call_operand.vmem [shape: f32[32,4], index: 10, kind: input, shape index: {}]
  %s11 = inlined_call_operand.vmem [shape: f32[1,4], index: 11, kind: input, shape index: {}]
  %s12 = inlined_call_operand.hbm [shape: f32[2,4], index: 12, kind: output, shape index: {0}]
  %s13 = inlined_call_operand.hbm [shape: f32[2,2,32], index: 13, kind: output, shape index: {1}]
  %s14 = inlined_call_operand.hbm [shape: f32[2,2,32], index: 14, kind: output, shape index: {2}]
  %15 = xla_tuple %s12, %s13, %s14
  %s16 = sld [smem:[#allocation0]]
  $region82: #{tpu_custom_call.1} parent=0
    _
  %s18 = ssub.s32 1, %s16
  %s19 = scalar_select 0, %s18, %s16
  $region1: #{tpu_custom_call.1} parent=0
    #allocation2 [shape = 'u8[2048]{0}', space=vmem, size = 0x800, scoped, tag = 'input window, operand 2, single buffered']
    #allocation3 [shape = 's32[1]{0}', space=sflag, size = 0x4, scoped, tag = 'scoped memory for tpu_custom_call.1']
    #allocation4 [shape = 's32[1]{0}', space=sflag, size = 0x4, scoped, tag = 'scoped memory for tpu_custom_call.1']
    #allocation5 [shape = 'u8[2048]{0}', space=vmem, size = 0x800, scoped, tag = 'input window, operand 3, single buffered']
    #allocation6 [shape = 's32[1]{0}', space=sflag, size = 0x4, scoped, tag = 'scoped memory for tpu_custom_call.1']
    #allocation7 [shape = 'u8[1024]{0}', space=vmem, size = 0x400, scoped, tag = 'output window, operand 0, single buffered']
    #allocation8 [shape = 'u8[2048]{0}', space=vmem, size = 0x800, scoped, tag = 'output window, operand 1, single buffered']
    #allocation9 [shape = 's32[1]{0}', space=sflag, size = 0x4, scoped, tag = 'scoped memory for tpu_custom_call.1']
    #allocation10 [shape = 'u8[2048]{0}', space=vmem, size = 0x800, scoped, tag = 'output window, operand 2, single buffered']
    %20 = vsyncpa [#allocation3], 0
    %21 = vsyncpa [#allocation6], 0
    %22 = vsyncpa [#allocation4], 0
    %23 = vsyncpa [#allocation9], 0
    // Predicated region
    $region2: #{tpu_custom_call.1} parent=1 // pred_check
      _
    $region3: #{tpu_custom_call.1} parent=1 // pred_check_branch
      %25 = sbr.rel (0) target = $region5
    $region4: #{tpu_custom_call.1} parent=1 // pred_region
      _
    $region5: #{tpu_custom_call.1} parent=1 // pred_fallthru
      _
    // Predicated region
    $region6: #{tpu_custom_call.1} parent=1 // pred_check
      _
    $region7: #{tpu_custom_call.1} parent=1 // pred_check_branch
      %27 = sbr.rel (0) target = $region9
    $region8: #{tpu_custom_call.1} parent=1 // pred_region
      _
    $region9: #{tpu_custom_call.1} parent=1 // pred_fallthru
      _
    // Predicated region
    $region10: #{tpu_custom_call.1} parent=1 // pred_check
      _
    $region11: #{tpu_custom_call.1} parent=1 // pred_check_branch
      %29 = sbr.rel (0) target = $region13
    $region12: #{tpu_custom_call.1} parent=1 // pred_region
      %s31 = ssub.s32 64, 64
      %32 = vsyncadd [#allocation3], %s31
      %s33 = sshll.u32 [#allocation2], 4
      %s34 = int_to_ptr.vmem [resolvable:$true] %s33
      %39 = dma.hbm_to_vmem [thread:$0]  %s2, 64, %s34, [#allocation3], 32, 32, 2
    $region13: #{tpu_custom_call.1} parent=1 // pred_fallthru
      _
    // Predicated region
    $region14: #{tpu_custom_call.1} parent=1 // pred_check
      _
    $region15: #{tpu_custom_call.1} parent=1 // pred_check_branch
      %41 = sbr.rel (0) target = $region17
    $region16: #{tpu_custom_call.1} parent=1 // pred_region
      %s43 = ssub.s32 64, 64
      %44 = vsyncadd [#allocation6], %s43
      %s45 = sshll.u32 [#allocation5], 4
      %s46 = int_to_ptr.vmem [resolvable:$true] %s45
      %51 = dma.hbm_to_vmem [thread:$0]  %s3, 64, %s46, [#allocation6], 32, 32, 2
    $region17: #{tpu_custom_call.1} parent=1 // pred_fallthru
      _
    // Predicated region
    $region18: #{tpu_custom_call.1} parent=1 // pred_check
      _
    $region19: #{tpu_custom_call.1} parent=1 // pred_check_branch
      %53 = sbr.rel (0) target = $region21
    $region20: #{tpu_custom_call.1} parent=1 // pred_region
      _
    $region21: #{tpu_custom_call.1} parent=1 // pred_fallthru
      _
    // Predicated region
    $region22: #{tpu_custom_call.1} parent=1 // pred_check
      _
    $region23: #{tpu_custom_call.1} parent=1 // pred_check_branch
      %55 = sbr.rel (0) target = $region25
    $region24: #{tpu_custom_call.1} parent=1 // pred_region
      _
    $region25: #{tpu_custom_call.1} parent=1 // pred_fallthru
      _
    // Predicated region
    $region26: #{tpu_custom_call.1} parent=1 // pred_check
      _
    $region27: #{tpu_custom_call.1} parent=1 // pred_check_branch
      %57 = sbr.rel (0) target = $region29
    $region28: #{tpu_custom_call.1} parent=1 // pred_region
      _
    $region29: #{tpu_custom_call.1} parent=1 // pred_fallthru
      _
    // Predicated region
    $region30: #{tpu_custom_call.1} parent=1 // pred_check
      _
    $region31: #{tpu_custom_call.1} parent=1 // pred_check_branch
      %59 = sbr.rel (0) target = $region33
    $region32: #{tpu_custom_call.1} parent=1 // pred_region
      _
    $region33: #{tpu_custom_call.1} parent=1 // pred_fallthru
      _
    // Predicated region
    $region34: #{tpu_custom_call.1} parent=1 // pred_check
      _
    $region35: #{tpu_custom_call.1} parent=1 // pred_check_branch
      %61 = sbr.rel (0) target = $region37
    $region36: #{tpu_custom_call.1} parent=1 // pred_region
      _
    $region37: #{tpu_custom_call.1} parent=1 // pred_fallthru
      _
    // Predicated region
    $region38: #{tpu_custom_call.1} parent=1 // pred_check
      _
    $region39: #{tpu_custom_call.1} parent=1 // pred_check_branch
      %63 = sbr.rel (0) target = $region41
    $region40: #{tpu_custom_call.1} parent=1 // pred_region
      _
    $region41: #{tpu_custom_call.1} parent=1 // pred_fallthru
      _
    // Predicated region
    $region42: #{tpu_custom_call.1} parent=1 // pred_check
      _
    $region43: #{tpu_custom_call.1} parent=1 // pred_check_branch
      %65 = sbr.rel (0) target = $region45
    $region44: #{tpu_custom_call.1} parent=1 // pred_region
      _
    $region45: #{tpu_custom_call.1} parent=1 // pred_fallthru
      _
    // Predicated region
    $region46: #{tpu_custom_call.1} parent=1 // pred_check
      _
    $region47: #{tpu_custom_call.1} parent=1 // pred_check_branch
      %67 = sbr.rel (0) target = $region49
    $region48: #{tpu_custom_call.1} parent=1 // pred_region
      _
    $region49: #{tpu_custom_call.1} parent=1 // pred_fallthru
      _
    // Predicated region
    $region50: #{tpu_custom_call.1} parent=1 // pred_check
      _
    $region51: #{tpu_custom_call.1} parent=1 // pred_check_branch
      %69 = sbr.rel (0) target = $region53
    $region52: #{tpu_custom_call.1} parent=1 // pred_region
      %70 = dma.done [#allocation3], 64
    $region53: #{tpu_custom_call.1} parent=1 // pred_fallthru
      _
    // Predicated region
    $region54: #{tpu_custom_call.1} parent=1 // pred_check
      _
    $region55: #{tpu_custom_call.1} parent=1 // pred_check_branch
      %72 = sbr.rel (0) target = $region57
    $region56: #{tpu_custom_call.1} parent=1 // pred_region
      %73 = dma.done [#allocation6], 64
    $region57: #{tpu_custom_call.1} parent=1 // pred_fallthru
      _
    %v74 = vld [vmem:[%s0] sm:$0xff]
    %v75 = vld [vmem:[%s0 + $0x8] sm:$0xff]
    %v76 = vlaneseq
    %v77 = vand.u32 %v76, 127
    %78 = vset.pattern.permute.xlu0 0
    %79 = vperm.xlu0 %78, %v74
    %v80 = vpop.permute.xlu0 %79
    %81 = vset.pattern.permute.xlu0 0
    %82 = vperm.xlu0 %81, %v75
    %v83 = vpop.permute.xlu0 %82
    %vm84 = vcmp.eq.s32.totalorder %v80, %v77
    %vm85 = vcmp.eq.s32.totalorder %v83, %v77
    %v86 = vsel %vm84, 1, 0
    %v87 = vsel %vm85, 1, 0
    %v88 = vcvt.s32.f32 %v86
    %v89 = vcvt.s32.f32 %v87
    %v90 = vld [vmem:[%s1] sm:$0xff]
    %v91 = vld [vmem:[%s1 + $0x8] sm:$0xff]
    %v92 = vld [vmem:[%s1 + $0x10] sm:$0xff]
    %v93 = vld [vmem:[%s1 + $0x18] sm:$0xff]
    %v94 = vld [vmem:[%s1 + $0x20] sm:$0xff]
    %v95 = vld [vmem:[%s1 + $0x28] sm:$0xff]
    %v96 = vld [vmem:[%s1 + $0x30] sm:$0xff]
    %v97 = vld [vmem:[%s1 + $0x38] sm:$0xff]
    %vm98 = vcmask 523264
    %v100 = vsel %vm98, %v88, 0
    %v103 = vsel %vm98, %v89, 0
    %105 = vmatprep.subr.mxu0 0.0
    %106 = vmatpush1.msra.mxu0 %v90
    %107 = vmatprep.subr.mxu0 0.0
    %108 = vmatpush1.msra.mxu0 %v91
    %109 = vmatprep.subr.mxu0 0.0
    %110 = vmatpush1.msra.mxu0 %v92
    %111 = vmatprep.subr.mxu0 0.0
    %112 = vmatpush1.msra.mxu0 %v93
    %113 = vmatprep.subr.mxu0 0.0
    %114 = vmatpush1.msra.mxu0 %v94
    %115 = vmatprep.subr.mxu0 0.0
    %116 = vmatpush1.msra.mxu0 %v95
    %117 = vmatprep.subr.mxu0 0.0
    %118 = vmatpush1.msra.mxu0 %v96
    %119 = vmatprep.subr.mxu0 0.0
    %120 = vmatpush1.msra.mxu0 %v97
    %121 = vmatprep.subr.mxu0 0.0
    %122 = vmatpush1.msra.mxu0 0.0
    %123 = vmatprep.subr.mxu0 0.0
    %124 = vmatpush1.msra.mxu0 0.0
    %125 = vmatprep.subr.mxu0 0.0
    %126 = vmatpush1.msra.mxu0 0.0
    %127 = vmatprep.subr.mxu0 0.0
    %128 = vmatpush1.msra.mxu0 0.0
    %129 = vmatprep.subr.mxu0 0.0
    %130 = vmatpush1.msra.mxu0 0.0
    %131 = vmatprep.subr.mxu0 0.0
    %132 = vmatpush1.msra.mxu0 0.0
    %133 = vmatprep.subr.mxu0 0.0
    %134 = vmatpush1.msra.mxu0 0.0
    %135 = vmatprep.subr.mxu0 0.0
    %136 = vmatpush1.msra.mxu0 0.0
    %137 = vmatprep.subr.mxu0 0.0
    %138 = vmatpush1.msra.mxu0 0.0
    %139 = vmatprep.subr.mxu0 0.0
    %140 = vmatpush1.msra.mxu0 0.0
    %141 = vmatprep.subr.mxu0 0.0
    %142 = vmatpush1.msra.mxu0 0.0
    %143 = vmatprep.subr.mxu0 0.0
    %144 = vmatpush1.msra.mxu0 0.0
    %145 = vmatprep.subr.mxu0 0.0
    %146 = vmatpush1.msra.mxu0 0.0
    %147 = vmatprep.subr.mxu0 0.0
    %148 = vmatpush1.msra.mxu0 0.0
    %149 = vmatprep.subr.mxu0 0.0
    %150 = vmatpush1.msra.mxu0 0.0
    %151 = vmatprep.subr.mxu0 0.0
    %152 = vmatpush1.msra.mxu0 0.0
    %153 = vmatprep.subr.mxu0 0.0
    %154 = vmatpush1.msra.mxu0 0.0
    %155 = vmatprep.subr.mxu0 0.0
    %156 = vmatpush1.msra.mxu0 0.0
    %157 = vmatprep.subr.mxu0 0.0
    %158 = vmatpush1.msra.mxu0 0.0
    %159 = vmatprep.subr.mxu0 0.0
    %160 = vmatpush1.msra.mxu0 0.0
    %161 = vmatprep.subr.mxu0 0.0
    %162 = vmatpush1.msra.mxu0 0.0
    %163 = vmatprep.subr.mxu0 0.0
    %164 = vmatpush1.msra.mxu0 0.0
    %165 = vmatprep.subr.mxu0 0.0
    %166 = vmatpush1.msra.mxu0 0.0
    %167 = vmatprep.subr.mxu0 0.0
    %168 = vmatpush1.msra.mxu0 0.0
    %169 = vmatprep.mubr.f32.mxu0 0.0
    %170 = vmatmul.mubr.f32.gmra.mrb[0].mxu0 %v100
    %v171 = vpop.f32.mrb[0].mxu0
    %v172 = vadd.f32 0.0, %v171
    %v173 = vpop.f32.mrb[0].mxu0
    %174 = vmatprep.mubr.f32.mxu0 0.0
    %175 = vmatmul.mubr.f32.gmra.mrb[0].mxu0 %v103
    %v176 = vpop.f32.mrb[0].mxu0
    %v177 = vadd.f32 0.0, %v176
    %v178 = vpop.f32.mrb[0].mxu0
    %179 = vdwg.mxu0
    %v180 = vld [vmem:[%s5] sm:$0xff]
    %v181 = vld [vmem:[%s5 + $0x8] sm:$0xff]
    %v182 = vld [vmem:[%s5 + $0x10] sm:$0xff]
    %v183 = vld [vmem:[%s5 + $0x18] sm:$0xff]
    %v184 = vld [vmem:[%s4] sm:$0xff]
    %v185 = vld [vmem:[%s4 + $0x8] sm:$0xff]
    %v186 = vld [vmem:[%s4 + $0x10] sm:$0xff]
    %v187 = vld [vmem:[%s4 + $0x18] sm:$0xff]
    %v188 = vld [vmem:[%s6] sm:$0x1]
    %v190 = vlaneseq
    %v191 = vshrl.u32 %v190, 7
    %v192 = vsub.s32 0, %v191
    %v193 = vrot.slane %v188, %v192
    %vm195 = vcmask 261120
    %v197 = vsel %vm195, %v172, 0
    %v200 = vsel %vm195, %v177, 0
    %202 = vmatprep.subr.mxu0 0.0
    %203 = vmatpush1.msra.mxu0 %v184
    %204 = vmatprep.subr.mxu0 0.0
    %205 = vmatpush1.msra.mxu0 %v185
    %206 = vmatprep.subr.mxu0 0.0
    %207 = vmatpush1.msra.mxu0 %v186
    %208 = vmatprep.subr.mxu0 0.0
    %209 = vmatpush1.msra.mxu0 %v187
    %210 = vmatprep.subr.mxu0 0.0
    %211 = vmatpush1.msra.mxu0 0.0
    %212 = vmatprep.subr.mxu0 0.0
    %213 = vmatpush1.msra.mxu0 0.0
    %214 = vmatprep.subr.mxu0 0.0
    %215 = vmatpush1.msra.mxu0 0.0
    %216 = vmatprep.subr.mxu0 0.0
    %217 = vmatpush1.msra.mxu0 0.0
    %218 = vmatprep.subr.mxu0 0.0
    %219 = vmatpush1.msra.mxu0 0.0
    %220 = vmatprep.subr.mxu0 0.0
    %221 = vmatpush1.msra.mxu0 0.0
    %222 = vmatprep.subr.mxu0 0.0
    %223 = vmatpush1.msra.mxu0 0.0
    %224 = vmatprep.subr.mxu0 0.0
    %225 = vmatpush1.msra.mxu0 0.0
    %226 = vmatprep.subr.mxu0 0.0
    %227 = vmatpush1.msra.mxu0 0.0
    %228 = vmatprep.subr.mxu0 0.0
    %229 = vmatpush1.msra.mxu0 0.0
    %230 = vmatprep.subr.mxu0 0.0
    %231 = vmatpush1.msra.mxu0 0.0
    %232 = vmatprep.subr.mxu0 0.0
    %233 = vmatpush1.msra.mxu0 0.0
    %234 = vmatprep.subr.mxu0 0.0
    %235 = vmatpush1.msra.mxu0 0.0
    %236 = vmatprep.subr.mxu0 0.0
    %237 = vmatpush1.msra.mxu0 0.0
    %238 = vmatprep.subr.mxu0 0.0
    %239 = vmatpush1.msra.mxu0 0.0
    %240 = vmatprep.subr.mxu0 0.0
    %241 = vmatpush1.msra.mxu0 0.0
    %242 = vmatprep.subr.mxu0 0.0
    %243 = vmatpush1.msra.mxu0 0.0
    %244 = vmatprep.subr.mxu0 0.0
    %245 = vmatpush1.msra.mxu0 0.0
    %246 = vmatprep.subr.mxu0 0.0
    %247 = vmatpush1.msra.mxu0 0.0
    %248 = vmatprep.subr.mxu0 0.0
    %249 = vmatpush1.msra.mxu0 0.0
    %250 = vmatprep.subr.mxu0 0.0
    %251 = vmatpush1.msra.mxu0 0.0
    %252 = vmatprep.subr.mxu0 0.0
    %253 = vmatpush1.msra.mxu0 0.0
    %254 = vmatprep.subr.mxu0 0.0
    %255 = vmatpush1.msra.mxu0 0.0
    %256 = vmatprep.subr.mxu0 0.0
    %257 = vmatpush1.msra.mxu0 0.0
    %258 = vmatprep.subr.mxu0 0.0
    %259 = vmatpush1.msra.mxu0 0.0
    %260 = vmatprep.subr.mxu0 0.0
    %261 = vmatpush1.msra.mxu0 0.0
    %262 = vmatprep.subr.mxu0 0.0
    %263 = vmatpush1.msra.mxu0 0.0
    %264 = vmatprep.subr.mxu0 0.0
    %265 = vmatpush1.msra.mxu0 0.0
    %266 = vmatprep.mubr.f32.mxu0 0.0
    %267 = vmatmul.mubr.f32.gmra.mrb[0].mxu0 %v197
    %v268 = vpop.f32.mrb[0].mxu0
    %v269 = vadd.f32 %v193, %v268
    %v270 = vpop.f32.mrb[0].mxu0
    %271 = vmatprep.mubr.f32.mxu0 0.0
    %272 = vmatmul.mubr.f32.gmra.mrb[0].mxu0 %v200
    %v273 = vpop.f32.mrb[0].mxu0
    %v274 = vadd.f32 %v193, %v273
    %v275 = vpop.f32.mrb[0].mxu0
    %276 = vdwg.mxu0
    %v277 = vld [vmem:[#allocation2] sm:$0x3]
    %v278 = vld [vmem:[#allocation5] sm:$0x3]
    %v280 = vsel %vm195, %v277, 0
    %282 = vmatprep.subr.mxu0 0.0
    %283 = vmatpush1.msra.mxu0 %v180
    %284 = vmatprep.subr.mxu0 0.0
    %285 = vmatpush1.msra.mxu0 %v181
    %286 = vmatprep.subr.mxu0 0.0
    %287 = vmatpush1.msra.mxu0 %v182
    %288 = vmatprep.subr.mxu0 0.0
    %289 = vmatpush1.msra.mxu0 %v183
    %290 = vmatprep.subr.mxu0 0.0
    %291 = vmatpush1.msra.mxu0 0.0
    %292 = vmatprep.subr.mxu0 0.0
    %293 = vmatpush1.msra.mxu0 0.0
    %294 = vmatprep.subr.mxu0 0.0
    %295 = vmatpush1.msra.mxu0 0.0
    %296 = vmatprep.subr.mxu0 0.0
    %297 = vmatpush1.msra.mxu0 0.0
    %298 = vmatprep.subr.mxu0 0.0
    %299 = vmatpush1.msra.mxu0 0.0
    %300 = vmatprep.subr.mxu0 0.0
    %301 = vmatpush1.msra.mxu0 0.0
    %302 = vmatprep.subr.mxu0 0.0
    %303 = vmatpush1.msra.mxu0 0.0
    %304 = vmatprep.subr.mxu0 0.0
    %305 = vmatpush1.msra.mxu0 0.0
    %306 = vmatprep.subr.mxu0 0.0
    %307 = vmatpush1.msra.mxu0 0.0
    %308 = vmatprep.subr.mxu0 0.0
    %309 = vmatpush1.msra.mxu0 0.0
    %310 = vmatprep.subr.mxu0 0.0
    %311 = vmatpush1.msra.mxu0 0.0
    %312 = vmatprep.subr.mxu0 0.0
    %313 = vmatpush1.msra.mxu0 0.0
    %314 = vmatprep.subr.mxu0 0.0
    %315 = vmatpush1.msra.mxu0 0.0
    %316 = vmatprep.subr.mxu0 0.0
    %317 = vmatpush1.msra.mxu0 0.0
    %318 = vmatprep.subr.mxu0 0.0
    %319 = vmatpush1.msra.mxu0 0.0
    %320 = vmatprep.subr.mxu0 0.0
    %321 = vmatpush1.msra.mxu0 0.0
    %322 = vmatprep.subr.mxu0 0.0
    %323 = vmatpush1.msra.mxu0 0.0
    %324 = vmatprep.subr.mxu0 0.0
    %325 = vmatpush1.msra.mxu0 0.0
    %326 = vmatprep.subr.mxu0 0.0
    %327 = vmatpush1.msra.mxu0 0.0
    %328 = vmatprep.subr.mxu0 0.0
    %329 = vmatpush1.msra.mxu0 0.0
    %330 = vmatprep.subr.mxu0 0.0
    %331 = vmatpush1.msra.mxu0 0.0
    %332 = vmatprep.subr.mxu0 0.0
    %333 = vmatpush1.msra.mxu0 0.0
    %334 = vmatprep.subr.mxu0 0.0
    %335 = vmatpush1.msra.mxu0 0.0
    %336 = vmatprep.subr.mxu0 0.0
    %337 = vmatpush1.msra.mxu0 0.0
    %338 = vmatprep.subr.mxu0 0.0
    %339 = vmatpush1.msra.mxu0 0.0
    %340 = vmatprep.subr.mxu0 0.0
    %341 = vmatpush1.msra.mxu0 0.0
    %342 = vmatprep.subr.mxu0 0.0
    %343 = vmatpush1.msra.mxu0 0.0
    %344 = vmatprep.subr.mxu0 0.0
    %345 = vmatpush1.msra.mxu0 0.0
    %346 = vmatprep.mubr.f32.mxu0 0.0
    %347 = vmatmul.mubr.f32.gmra.mrb[0].mxu0 %v280
    %v348 = vpop.f32.mrb[0].mxu0
    %v349 = vadd.f32 0.0, %v348
    %v350 = vpop.f32.mrb[0].mxu0
    %351 = vdwg.mxu0
    %v352 = vadd.f32 %v269, %v349
    %v353 = vxor.u32 %v352, 2147483648
    %v354 = vmul.f32 %v353, 1.442695
    %v355 = vpow.pop %v354
    %v356 = vadd.f32 %v355, 1.0
    %v357 = vrcp.pop %v356
    %v358 = vmul.f32 1.0, %v357
    %v359 = vtanh.pop %v352
    %361 = vrot.lane.b32.xlu0 %v278, 32
    %v362 = vpop.permute.xlu0 %361
    %v364 = vmul.f32 %v358, %v362
    %366 = vrot.lane.b32.xlu0 %v359, 64
    %v367 = vpop.permute.xlu0 %366
    %v369 = vmul.f32 %v358, %v367
    %371 = vrot.lane.b32.xlu0 %v369, 32
    %v372 = vpop.permute.xlu0 %371
    %v374 = vadd.f32 %v364, %v372
    %v375 = vtanh.pop %v374
    %377 = vrot.lane.b32.xlu0 %v375, 64
    %v378 = vpop.permute.xlu0 %377
    %v380 = vmul.f32 %v358, %v378
    %382 = vrot.lane.b32.xlu0 %v380, 32
    %v383 = vpop.permute.xlu0 %382
    %v384 = vsel %vm195, %v383, 0
    %386 = vmatprep.subr.mxu0 0.0
    %387 = vmatpush1.msra.mxu0 %v180
    %388 = vmatprep.subr.mxu0 0.0
    %389 = vmatpush1.msra.mxu0 %v181
    %390 = vmatprep.subr.mxu0 0.0
    %391 = vmatpush1.msra.mxu0 %v182
    %392 = vmatprep.subr.mxu0 0.0
    %393 = vmatpush1.msra.mxu0 %v183
    %394 = vmatprep.subr.mxu0 0.0
    %395 = vmatpush1.msra.mxu0 0.0
    %396 = vmatprep.subr.mxu0 0.0
    %397 = vmatpush1.msra.mxu0 0.0
    %398 = vmatprep.subr.mxu0 0.0
    %399 = vmatpush1.msra.mxu0 0.0
    %400 = vmatprep.subr.mxu0 0.0
    %401 = vmatpush1.msra.mxu0 0.0
    %402 = vmatprep.subr.mxu0 0.0
    %403 = vmatpush1.msra.mxu0 0.0
    %404 = vmatprep.subr.mxu0 0.0
    %405 = vmatpush1.msra.mxu0 0.0
    %406 = vmatprep.subr.mxu0 0.0
    %407 = vmatpush1.msra.mxu0 0.0
    %408 = vmatprep.subr.mxu0 0.0
    %409 = vmatpush1.msra.mxu0 0.0
    %410 = vmatprep.subr.mxu0 0.0
    %411 = vmatpush1.msra.mxu0 0.0
    %412 = vmatprep.subr.mxu0 0.0
    %413 = vmatpush1.msra.mxu0 0.0
    %414 = vmatprep.subr.mxu0 0.0
    %415 = vmatpush1.msra.mxu0 0.0
    %416 = vmatprep.subr.mxu0 0.0
    %417 = vmatpush1.msra.mxu0 0.0
    %418 = vmatprep.subr.mxu0 0.0
    %419 = vmatpush1.msra.mxu0 0.0
    %420 = vmatprep.subr.mxu0 0.0
    %421 = vmatpush1.msra.mxu0 0.0
    %422 = vmatprep.subr.mxu0 0.0
    %423 = vmatpush1.msra.mxu0 0.0
    %424 = vmatprep.subr.mxu0 0.0
    %425 = vmatpush1.msra.mxu0 0.0
    %426 = vmatprep.subr.mxu0 0.0
    %427 = vmatpush1.msra.mxu0 0.0
    %428 = vmatprep.subr.mxu0 0.0
    %429 = vmatpush1.msra.mxu0 0.0
    %430 = vmatprep.subr.mxu0 0.0
    %431 = vmatpush1.msra.mxu0 0.0
    %432 = vmatprep.subr.mxu0 0.0
    %433 = vmatpush1.msra.mxu0 0.0
    %434 = vmatprep.subr.mxu0 0.0
    %435 = vmatpush1.msra.mxu0 0.0
    %436 = vmatprep.subr.mxu0 0.0
    %437 = vmatpush1.msra.mxu0 0.0
    %438 = vmatprep.subr.mxu0 0.0
    %439 = vmatpush1.msra.mxu0 0.0
    %440 = vmatprep.subr.mxu0 0.0
    %441 = vmatpush1.msra.mxu0 0.0
    %442 = vmatprep.subr.mxu0 0.0
    %443 = vmatpush1.msra.mxu0 0.0
    %444 = vmatprep.subr.mxu0 0.0
    %445 = vmatpush1.msra.mxu0 0.0
    %446 = vmatprep.subr.mxu0 0.0
    %447 = vmatpush1.msra.mxu0 0.0
    %448 = vmatprep.subr.mxu0 0.0
    %449 = vmatpush1.msra.mxu0 0.0
    %450 = vmatprep.mubr.f32.mxu0 0.0
    %451 = vmatmul.mubr.f32.gmra.mrb[0].mxu0 %v384
    %v452 = vpop.f32.mrb[0].mxu0
    %v453 = vadd.f32 0.0, %v452
    %v454 = vpop.f32.mrb[0].mxu0
    %455 = vdwg.mxu0
    %v457 = vrot.slane %v453, 6
    %v459 = vadd.f32 %v269, %v457
    %v460 = vxor.u32 %v459, 2147483648
    %v461 = vmul.f32 %v460, 1.442695
    %v462 = vpow.pop %v461
    %v463 = vadd.f32 %v462, 1.0
    %v464 = vrcp.pop %v463
    %v465 = vmul.f32 1.0, %v464
    %v466 = vtanh.pop %v459
    %v468 = vrot.slane %v374, 6
    %v470 = vmul.f32 %v465, %v468
    %472 = vrot.lane.b32.xlu0 %v466, 64
    %v473 = vpop.permute.xlu0 %472
    %v475 = vmul.f32 %v465, %v473
    %477 = vrot.lane.b32.xlu0 %v475, 32
    %v478 = vpop.permute.xlu0 %477
    %v480 = vadd.f32 %v470, %v478
    %v481 = vtanh.pop %v480
    %483 = vrot.lane.b32.xlu0 %v481, 64
    %v484 = vpop.permute.xlu0 %483
    %v486 = vmul.f32 %v465, %v484
    %v488 = vrot.slane %v486, 2
    %489 = vrot.lane.b32.xlu0 %v488, 32
    %v490 = vpop.permute.xlu0 %489
    %v491 = vsel %vm195, %v490, 0
    %493 = vmatprep.subr.mxu0 0.0
    %494 = vmatpush1.msra.mxu0 %v180
    %495 = vmatprep.subr.mxu0 0.0
    %496 = vmatpush1.msra.mxu0 %v181
    %497 = vmatprep.subr.mxu0 0.0
    %498 = vmatpush1.msra.mxu0 %v182
    %499 = vmatprep.subr.mxu0 0.0
    %500 = vmatpush1.msra.mxu0 %v183
    %501 = vmatprep.subr.mxu0 0.0
    %502 = vmatpush1.msra.mxu0 0.0
    %503 = vmatprep.subr.mxu0 0.0
    %504 = vmatpush1.msra.mxu0 0.0
    %505 = vmatprep.subr.mxu0 0.0
    %506 = vmatpush1.msra.mxu0 0.0
    %507 = vmatprep.subr.mxu0 0.0
    %508 = vmatpush1.msra.mxu0 0.0
    %509 = vmatprep.subr.mxu0 0.0
    %510 = vmatpush1.msra.mxu0 0.0
    %511 = vmatprep.subr.mxu0 0.0
    %512 = vmatpush1.msra.mxu0 0.0
    %513 = vmatprep.subr.mxu0 0.0
    %514 = vmatpush1.msra.mxu0 0.0
    %515 = vmatprep.subr.mxu0 0.0
    %516 = vmatpush1.msra.mxu0 0.0
    %517 = vmatprep.subr.mxu0 0.0
    %518 = vmatpush1.msra.mxu0 0.0
    %519 = vmatprep.subr.mxu0 0.0
    %520 = vmatpush1.msra.mxu0 0.0
    %521 = vmatprep.subr.mxu0 0.0
    %522 = vmatpush1.msra.mxu0 0.0
    %523 = vmatprep.subr.mxu0 0.0
    %524 = vmatpush1.msra.mxu0 0.0
    %525 = vmatprep.subr.mxu0 0.0
    %526 = vmatpush1.msra.mxu0 0.0
    %527 = vmatprep.subr.mxu0 0.0
    %528 = vmatpush1.msra.mxu0 0.0
    %529 = vmatprep.subr.mxu0 0.0
    %530 = vmatpush1.msra.mxu0 0.0
    %531 = vmatprep.subr.mxu0 0.0
    %532 = vmatpush1.msra.mxu0 0.0
    %533 = vmatprep.subr.mxu0 0.0
    %534 = vmatpush1.msra.mxu0 0.0
    %535 = vmatprep.subr.mxu0 0.0
    %536 = vmatpush1.msra.mxu0 0.0
    %537 = vmatprep.subr.mxu0 0.0
    %538 = vmatpush1.msra.mxu0 0.0
    %539 = vmatprep.subr.mxu0 0.0
    %540 = vmatpush1.msra.mxu0 0.0
    %541 = vmatprep.subr.mxu0 0.0
    %542 = vmatpush1.msra.mxu0 0.0
    %543 = vmatprep.subr.mxu0 0.0
    %544 = vmatpush1.msra.mxu0 0.0
    %545 = vmatprep.subr.mxu0 0.0
    %546 = vmatpush1.msra.mxu0 0.0
    %547 = vmatprep.subr.mxu0 0.0
    %548 = vmatpush1.msra.mxu0 0.0
    %549 = vmatprep.subr.mxu0 0.0
    %550 = vmatpush1.msra.mxu0 0.0
    %551 = vmatprep.subr.mxu0 0.0
    %552 = vmatpush1.msra.mxu0 0.0
    %553 = vmatprep.subr.mxu0 0.0
    %554 = vmatpush1.msra.mxu0 0.0
    %555 = vmatprep.subr.mxu0 0.0
    %556 = vmatpush1.msra.mxu0 0.0
    %557 = vmatprep.mubr.f32.mxu0 0.0
    %558 = vmatmul.mubr.f32.gmra.mrb[0].mxu0 %v491
    %v559 = vpop.f32.mrb[0].mxu0
    %v560 = vadd.f32 0.0, %v559
    %v561 = vpop.f32.mrb[0].mxu0
    %562 = vdwg.mxu0
    %v564 = vrot.slane %v560, 4
    %v566 = vadd.f32 %v269, %v564
    %v567 = vxor.u32 %v566, 2147483648
    %v568 = vmul.f32 %v567, 1.442695
    %v569 = vpow.pop %v568
    %v570 = vadd.f32 %v569, 1.0
    %v571 = vrcp.pop %v570
    %v572 = vmul.f32 1.0, %v571
    %v573 = vtanh.pop %v566
    %v575 = vrot.slane %v480, 6
    %v577 = vmul.f32 %v572, %v575
    %579 = vrot.lane.b32.xlu0 %v573, 64
    %v580 = vpop.permute.xlu0 %579
    %v582 = vmul.f32 %v572, %v580
    %584 = vrot.lane.b32.xlu0 %v582, 32
    %v585 = vpop.permute.xlu0 %584
    %v587 = vadd.f32 %v577, %v585
    %v588 = vtanh.pop %v587
    %590 = vrot.lane.b32.xlu0 %v588, 64
    %v591 = vpop.permute.xlu0 %590
    %v593 = vmul.f32 %v572, %v591
    %v595 = vrot.slane %v593, 4
    %596 = vrot.lane.b32.xlu0 %v595, 32
    %v597 = vpop.permute.xlu0 %596
    %v598 = vsel %vm195, %v597, 0
    %600 = vmatprep.subr.mxu0 0.0
    %601 = vmatpush1.msra.mxu0 %v180
    %602 = vmatprep.subr.mxu0 0.0
    %603 = vmatpush1.msra.mxu0 %v181
    %604 = vmatprep.subr.mxu0 0.0
    %605 = vmatpush1.msra.mxu0 %v182
    %606 = vmatprep.subr.mxu0 0.0
    %607 = vmatpush1.msra.mxu0 %v183
    %608 = vmatprep.subr.mxu0 0.0
    %609 = vmatpush1.msra.mxu0 0.0
    %610 = vmatprep.subr.mxu0 0.0
    %611 = vmatpush1.msra.mxu0 0.0
    %612 = vmatprep.subr.mxu0 0.0
    %613 = vmatpush1.msra.mxu0 0.0
    %614 = vmatprep.subr.mxu0 0.0
    %615 = vmatpush1.msra.mxu0 0.0
    %616 = vmatprep.subr.mxu0 0.0
    %617 = vmatpush1.msra.mxu0 0.0
    %618 = vmatprep.subr.mxu0 0.0
    %619 = vmatpush1.msra.mxu0 0.0
    %620 = vmatprep.subr.mxu0 0.0
    %621 = vmatpush1.msra.mxu0 0.0
    %622 = vmatprep.subr.mxu0 0.0
    %623 = vmatpush1.msra.mxu0 0.0
    %624 = vmatprep.subr.mxu0 0.0
    %625 = vmatpush1.msra.mxu0 0.0
    %626 = vmatprep.subr.mxu0 0.0
    %627 = vmatpush1.msra.mxu0 0.0
    %628 = vmatprep.subr.mxu0 0.0
    %629 = vmatpush1.msra.mxu0 0.0
    %630 = vmatprep.subr.mxu0 0.0
    %631 = vmatpush1.msra.mxu0 0.0
    %632 = vmatprep.subr.mxu0 0.0
    %633 = vmatpush1.msra.mxu0 0.0
    %634 = vmatprep.subr.mxu0 0.0
    %635 = vmatpush1.msra.mxu0 0.0
    %636 = vmatprep.subr.mxu0 0.0
    %637 = vmatpush1.msra.mxu0 0.0
    %638 = vmatprep.subr.mxu0 0.0
    %639 = vmatpush1.msra.mxu0 0.0
    %640 = vmatprep.subr.mxu0 0.0
    %641 = vmatpush1.msra.mxu0 0.0
    %642 = vmatprep.subr.mxu0 0.0
    %643 = vmatpush1.msra.mxu0 0.0
    %644 = vmatprep.subr.mxu0 0.0
    %645 = vmatpush1.msra.mxu0 0.0
    %646 = vmatprep.subr.mxu0 0.0
    %647 = vmatpush1.msra.mxu0 0.0
    %648 = vmatprep.subr.mxu0 0.0
    %649 = vmatpush1.msra.mxu0 0.0
    %650 = vmatprep.subr.mxu0 0.0
    %651 = vmatpush1.msra.mxu0 0.0
    %652 = vmatprep.subr.mxu0 0.0
    %653 = vmatpush1.msra.mxu0 0.0
    %654 = vmatprep.subr.mxu0 0.0
    %655 = vmatpush1.msra.mxu0 0.0
    %656 = vmatprep.subr.mxu0 0.0
    %657 = vmatpush1.msra.mxu0 0.0
    %658 = vmatprep.subr.mxu0 0.0
    %659 = vmatpush1.msra.mxu0 0.0
    %660 = vmatprep.subr.mxu0 0.0
    %661 = vmatpush1.msra.mxu0 0.0
    %662 = vmatprep.subr.mxu0 0.0
    %663 = vmatpush1.msra.mxu0 0.0
    %664 = vmatprep.mubr.f32.mxu0 0.0
    %665 = vmatmul.mubr.f32.gmra.mrb[0].mxu0 %v598
    %v666 = vpop.f32.mrb[0].mxu0
    %v667 = vadd.f32 0.0, %v666
    %v668 = vpop.f32.mrb[0].mxu0
    %669 = vdwg.mxu0
    %v671 = vrot.slane %v667, 2
    %v673 = vadd.f32 %v269, %v671
    %v674 = vxor.u32 %v673, 2147483648
    %v675 = vmul.f32 %v674, 1.442695
    %v676 = vpow.pop %v675
    %v677 = vadd.f32 %v676, 1.0
    %v678 = vrcp.pop %v677
    %v679 = vmul.f32 1.0, %v678
    %v680 = vtanh.pop %v673
    %v682 = vrot.slane %v587, 6
    %v684 = vmul.f32 %v679, %v682
    %686 = vrot.lane.b32.xlu0 %v680, 64
    %v687 = vpop.permute.xlu0 %686
    %v689 = vmul.f32 %v679, %v687
    %691 = vrot.lane.b32.xlu0 %v689, 32
    %v692 = vpop.permute.xlu0 %691
    %v694 = vadd.f32 %v684, %v692
    %v695 = vtanh.pop %v694
    %697 = vrot.lane.b32.xlu0 %v695, 64
    %v698 = vpop.permute.xlu0 %697
    %v700 = vmul.f32 %v679, %v698
    %v702 = vrot.slane %v700, 6
    %703 = vrot.lane.b32.xlu0 %v702, 32
    %v704 = vpop.permute.xlu0 %703
    %v705 = vsel %vm195, %v704, 0
    %707 = vmatprep.subr.mxu0 0.0
    %708 = vmatpush1.msra.mxu0 %v180
    %709 = vmatprep.subr.mxu0 0.0
    %710 = vmatpush1.msra.mxu0 %v181
    %711 = vmatprep.subr.mxu0 0.0
    %712 = vmatpush1.msra.mxu0 %v182
    %713 = vmatprep.subr.mxu0 0.0
    %714 = vmatpush1.msra.mxu0 %v183
    %715 = vmatprep.subr.mxu0 0.0
    %716 = vmatpush1.msra.mxu0 0.0
    %717 = vmatprep.subr.mxu0 0.0
    %718 = vmatpush1.msra.mxu0 0.0
    %719 = vmatprep.subr.mxu0 0.0
    %720 = vmatpush1.msra.mxu0 0.0
    %721 = vmatprep.subr.mxu0 0.0
    %722 = vmatpush1.msra.mxu0 0.0
    %723 = vmatprep.subr.mxu0 0.0
    %724 = vmatpush1.msra.mxu0 0.0
    %725 = vmatprep.subr.mxu0 0.0
    %726 = vmatpush1.msra.mxu0 0.0
    %727 = vmatprep.subr.mxu0 0.0
    %728 = vmatpush1.msra.mxu0 0.0
    %729 = vmatprep.subr.mxu0 0.0
    %730 = vmatpush1.msra.mxu0 0.0
    %731 = vmatprep.subr.mxu0 0.0
    %732 = vmatpush1.msra.mxu0 0.0
    %733 = vmatprep.subr.mxu0 0.0
    %734 = vmatpush1.msra.mxu0 0.0
    %735 = vmatprep.subr.mxu0 0.0
    %736 = vmatpush1.msra.mxu0 0.0
    %737 = vmatprep.subr.mxu0 0.0
    %738 = vmatpush1.msra.mxu0 0.0
    %739 = vmatprep.subr.mxu0 0.0
    %740 = vmatpush1.msra.mxu0 0.0
    %741 = vmatprep.subr.mxu0 0.0
    %742 = vmatpush1.msra.mxu0 0.0
    %743 = vmatprep.subr.mxu0 0.0
    %744 = vmatpush1.msra.mxu0 0.0
    %745 = vmatprep.subr.mxu0 0.0
    %746 = vmatpush1.msra.mxu0 0.0
    %747 = vmatprep.subr.mxu0 0.0
    %748 = vmatpush1.msra.mxu0 0.0
    %749 = vmatprep.subr.mxu0 0.0
    %750 = vmatpush1.msra.mxu0 0.0
    %751 = vmatprep.subr.mxu0 0.0
    %752 = vmatpush1.msra.mxu0 0.0
    %753 = vmatprep.subr.mxu0 0.0
    %754 = vmatpush1.msra.mxu0 0.0
    %755 = vmatprep.subr.mxu0 0.0
    %756 = vmatpush1.msra.mxu0 0.0
    %757 = vmatprep.subr.mxu0 0.0
    %758 = vmatpush1.msra.mxu0 0.0
    %759 = vmatprep.subr.mxu0 0.0
    %760 = vmatpush1.msra.mxu0 0.0
    %761 = vmatprep.subr.mxu0 0.0
    %762 = vmatpush1.msra.mxu0 0.0
    %763 = vmatprep.subr.mxu0 0.0
    %764 = vmatpush1.msra.mxu0 0.0
    %765 = vmatprep.subr.mxu0 0.0
    %766 = vmatpush1.msra.mxu0 0.0
    %767 = vmatprep.subr.mxu0 0.0
    %768 = vmatpush1.msra.mxu0 0.0
    %769 = vmatprep.subr.mxu0 0.0
    %770 = vmatpush1.msra.mxu0 0.0
    %771 = vmatprep.mubr.f32.mxu0 0.0
    %772 = vmatmul.mubr.f32.gmra.mrb[0].mxu0 %v705
    %v773 = vpop.f32.mrb[0].mxu0
    %v774 = vadd.f32 0.0, %v773
    %v775 = vpop.f32.mrb[0].mxu0
    %776 = vdwg.mxu0
    %v777 = vadd.f32 %v274, %v774
    %v778 = vxor.u32 %v777, 2147483648
    %v779 = vmul.f32 %v778, 1.442695
    %v780 = vpow.pop %v779
    %v781 = vadd.f32 %v780, 1.0
    %v782 = vrcp.pop %v781
    %v783 = vmul.f32 1.0, %v782
    %v784 = vtanh.pop %v777
    %v786 = vrot.slane %v694, 6
    %v788 = vmul.f32 %v783, %v786
    %790 = vrot.lane.b32.xlu0 %v784, 64
    %v791 = vpop.permute.xlu0 %790
    %v793 = vmul.f32 %v783, %v791
    %795 = vrot.lane.b32.xlu0 %v793, 32
    %v796 = vpop.permute.xlu0 %795
    %v798 = vadd.f32 %v788, %v796
    %v799 = vtanh.pop %v798
    %801 = vrot.lane.b32.xlu0 %v799, 64
    %v802 = vpop.permute.xlu0 %801
    %v804 = vmul.f32 %v783, %v802
    %806 = vrot.lane.b32.xlu0 %v804, 32
    %v807 = vpop.permute.xlu0 %806
    %v808 = vsel %vm195, %v807, 0
    %810 = vmatprep.subr.mxu0 0.0
    %811 = vmatpush1.msra.mxu0 %v180
    %812 = vmatprep.subr.mxu0 0.0
    %813 = vmatpush1.msra.mxu0 %v181
    %814 = vmatprep.subr.mxu0 0.0
    %815 = vmatpush1.msra.mxu0 %v182
    %816 = vmatprep.subr.mxu0 0.0
    %817 = vmatpush1.msra.mxu0 %v183
    %818 = vmatprep.subr.mxu0 0.0
    %819 = vmatpush1.msra.mxu0 0.0
    %820 = vmatprep.subr.mxu0 0.0
    %821 = vmatpush1.msra.mxu0 0.0
    %822 = vmatprep.subr.mxu0 0.0
    %823 = vmatpush1.msra.mxu0 0.0
    %824 = vmatprep.subr.mxu0 0.0
    %825 = vmatpush1.msra.mxu0 0.0
    %826 = vmatprep.subr.mxu0 0.0
    %827 = vmatpush1.msra.mxu0 0.0
    %828 = vmatprep.subr.mxu0 0.0
    %829 = vmatpush1.msra.mxu0 0.0
    %830 = vmatprep.subr.mxu0 0.0
    %831 = vmatpush1.msra.mxu0 0.0
    %832 = vmatprep.subr.mxu0 0.0
    %833 = vmatpush1.msra.mxu0 0.0
    %834 = vmatprep.subr.mxu0 0.0
    %835 = vmatpush1.msra.mxu0 0.0
    %836 = vmatprep.subr.mxu0 0.0
    %837 = vmatpush1.msra.mxu0 0.0
    %838 = vmatprep.subr.mxu0 0.0
    %839 = vmatpush1.msra.mxu0 0.0
    %840 = vmatprep.subr.mxu0 0.0
    %841 = vmatpush1.msra.mxu0 0.0
    %842 = vmatprep.subr.mxu0 0.0
    %843 = vmatpush1.msra.mxu0 0.0
    %844 = vmatprep.subr.mxu0 0.0
    %845 = vmatpush1.msra.mxu0 0.0
    %846 = vmatprep.subr.mxu0 0.0
    %847 = vmatpush1.msra.mxu0 0.0
    %848 = vmatprep.subr.mxu0 0.0
    %849 = vmatpush1.msra.mxu0 0.0
    %850 = vmatprep.subr.mxu0 0.0
    %851 = vmatpush1.msra.mxu0 0.0
    %852 = vmatprep.subr.mxu0 0.0
    %853 = vmatpush1.msra.mxu0 0.0
    %854 = vmatprep.subr.mxu0 0.0
    %855 = vmatpush1.msra.mxu0 0.0
    %856 = vmatprep.subr.mxu0 0.0
    %857 = vmatpush1.msra.mxu0 0.0
    %858 = vmatprep.subr.mxu0 0.0
    %859 = vmatpush1.msra.mxu0 0.0
    %860 = vmatprep.subr.mxu0 0.0
    %861 = vmatpush1.msra.mxu0 0.0
    %862 = vmatprep.subr.mxu0 0.0
    %863 = vmatpush1.msra.mxu0 0.0
    %864 = vmatprep.subr.mxu0 0.0
    %865 = vmatpush1.msra.mxu0 0.0
    %866 = vmatprep.subr.mxu0 0.0
    %867 = vmatpush1.msra.mxu0 0.0
    %868 = vmatprep.subr.mxu0 0.0
    %869 = vmatpush1.msra.mxu0 0.0
    %870 = vmatprep.subr.mxu0 0.0
    %871 = vmatpush1.msra.mxu0 0.0
    %872 = vmatprep.subr.mxu0 0.0
    %873 = vmatpush1.msra.mxu0 0.0
    %874 = vmatprep.mubr.f32.mxu0 0.0
    %875 = vmatmul.mubr.f32.gmra.mrb[0].mxu0 %v808
    %v876 = vpop.f32.mrb[0].mxu0
    %v877 = vadd.f32 0.0, %v876
    %v878 = vpop.f32.mrb[0].mxu0
    %879 = vdwg.mxu0
    %v881 = vrot.slane %v877, 6
    %v883 = vadd.f32 %v274, %v881
    %v884 = vxor.u32 %v883, 2147483648
    %v885 = vmul.f32 %v884, 1.442695
    %v886 = vpow.pop %v885
    %v887 = vadd.f32 %v886, 1.0
    %v888 = vrcp.pop %v887
    %v889 = vmul.f32 1.0, %v888
    %v890 = vtanh.pop %v883
    %v892 = vrot.slane %v798, 6
    %v894 = vmul.f32 %v889, %v892
    %896 = vrot.lane.b32.xlu0 %v890, 64
    %v897 = vpop.permute.xlu0 %896
    %v899 = vmul.f32 %v889, %v897
    %901 = vrot.lane.b32.xlu0 %v899, 32
    %v902 = vpop.permute.xlu0 %901
    %v904 = vadd.f32 %v894, %v902
    %v905 = vtanh.pop %v904
    %907 = vrot.lane.b32.xlu0 %v905, 64
    %v908 = vpop.permute.xlu0 %907
    %v910 = vmul.f32 %v889, %v908
    %v912 = vrot.slane %v910, 2
    %913 = vrot.lane.b32.xlu0 %v912, 32
    %v914 = vpop.permute.xlu0 %913
    %v915 = vsel %vm195, %v914, 0
    %917 = vmatprep.subr.mxu0 0.0
    %918 = vmatpush1.msra.mxu0 %v180
    %919 = vmatprep.subr.mxu0 0.0
    %920 = vmatpush1.msra.mxu0 %v181
    %921 = vmatprep.subr.mxu0 0.0
    %922 = vmatpush1.msra.mxu0 %v182
    %923 = vmatprep.subr.mxu0 0.0
    %924 = vmatpush1.msra.mxu0 %v183
    %925 = vmatprep.subr.mxu0 0.0
    %926 = vmatpush1.msra.mxu0 0.0
    %927 = vmatprep.subr.mxu0 0.0
    %928 = vmatpush1.msra.mxu0 0.0
    %929 = vmatprep.subr.mxu0 0.0
    %930 = vmatpush1.msra.mxu0 0.0
    %931 = vmatprep.subr.mxu0 0.0
    %932 = vmatpush1.msra.mxu0 0.0
    %933 = vmatprep.subr.mxu0 0.0
    %934 = vmatpush1.msra.mxu0 0.0
    %935 = vmatprep.subr.mxu0 0.0
    %936 = vmatpush1.msra.mxu0 0.0
    %937 = vmatprep.subr.mxu0 0.0
    %938 = vmatpush1.msra.mxu0 0.0
    %939 = vmatprep.subr.mxu0 0.0
    %940 = vmatpush1.msra.mxu0 0.0
    %941 = vmatprep.subr.mxu0 0.0
    %942 = vmatpush1.msra.mxu0 0.0
    %943 = vmatprep.subr.mxu0 0.0
    %944 = vmatpush1.msra.mxu0 0.0
    %945 = vmatprep.subr.mxu0 0.0
    %946 = vmatpush1.msra.mxu0 0.0
    %947 = vmatprep.subr.mxu0 0.0
    %948 = vmatpush1.msra.mxu0 0.0
    %949 = vmatprep.subr.mxu0 0.0
    %950 = vmatpush1.msra.mxu0 0.0
    %951 = vmatprep.subr.mxu0 0.0
    %952 = vmatpush1.msra.mxu0 0.0
    %953 = vmatprep.subr.mxu0 0.0
    %954 = vmatpush1.msra.mxu0 0.0
    %955 = vmatprep.subr.mxu0 0.0
    %956 = vmatpush1.msra.mxu0 0.0
    %957 = vmatprep.subr.mxu0 0.0
    %958 = vmatpush1.msra.mxu0 0.0
    %959 = vmatprep.subr.mxu0 0.0
    %960 = vmatpush1.msra.mxu0 0.0
    %961 = vmatprep.subr.mxu0 0.0
    %962 = vmatpush1.msra.mxu0 0.0
    %963 = vmatprep.subr.mxu0 0.0
    %964 = vmatpush1.msra.mxu0 0.0
    %965 = vmatprep.subr.mxu0 0.0
    %966 = vmatpush1.msra.mxu0 0.0
    %967 = vmatprep.subr.mxu0 0.0
    %968 = vmatpush1.msra.mxu0 0.0
    %969 = vmatprep.subr.mxu0 0.0
    %970 = vmatpush1.msra.mxu0 0.0
    %971 = vmatprep.subr.mxu0 0.0
    %972 = vmatpush1.msra.mxu0 0.0
    %973 = vmatprep.subr.mxu0 0.0
    %974 = vmatpush1.msra.mxu0 0.0
    %975 = vmatprep.subr.mxu0 0.0
    %976 = vmatpush1.msra.mxu0 0.0
    %977 = vmatprep.subr.mxu0 0.0
    %978 = vmatpush1.msra.mxu0 0.0
    %979 = vmatprep.subr.mxu0 0.0
    %980 = vmatpush1.msra.mxu0 0.0
    %981 = vmatprep.mubr.f32.mxu0 0.0
    %982 = vmatmul.mubr.f32.gmra.mrb[0].mxu0 %v915
    %v983 = vpop.f32.mrb[0].mxu0
    %v984 = vadd.f32 0.0, %v983
    %v985 = vpop.f32.mrb[0].mxu0
    %986 = vdwg.mxu0
    %v988 = vrot.slane %v984, 4
    %v990 = vadd.f32 %v274, %v988
    %v991 = vxor.u32 %v990, 2147483648
    %v992 = vmul.f32 %v991, 1.442695
    %v993 = vpow.pop %v992
    %v994 = vadd.f32 %v993, 1.0
    %v995 = vrcp.pop %v994
    %v996 = vmul.f32 1.0, %v995
    %v997 = vtanh.pop %v990
    %v999 = vrot.slane %v904, 6
    %v1001 = vmul.f32 %v996, %v999
    %1003 = vrot.lane.b32.xlu0 %v997, 64
    %v1004 = vpop.permute.xlu0 %1003
    %v1006 = vmul.f32 %v996, %v1004
    %1008 = vrot.lane.b32.xlu0 %v1006, 32
    %v1009 = vpop.permute.xlu0 %1008
    %v1011 = vadd.f32 %v1001, %v1009
    %v1012 = vtanh.pop %v1011
    %1014 = vrot.lane.b32.xlu0 %v1012, 64
    %v1015 = vpop.permute.xlu0 %1014
    %v1017 = vmul.f32 %v996, %v1015
    %v1019 = vrot.slane %v1017, 4
    %1020 = vrot.lane.b32.xlu0 %v1019, 32
    %v1021 = vpop.permute.xlu0 %1020
    %v1022 = vsel %vm195, %v1021, 0
    %1024 = vmatprep.subr.mxu0 0.0
    %1025 = vmatpush1.msra.mxu0 %v180
    %1026 = vmatprep.subr.mxu0 0.0
    %1027 = vmatpush1.msra.mxu0 %v181
    %1028 = vmatprep.subr.mxu0 0.0
    %1029 = vmatpush1.msra.mxu0 %v182
    %1030 = vmatprep.subr.mxu0 0.0
    %1031 = vmatpush1.msra.mxu0 %v183
    %1032 = vmatprep.subr.mxu0 0.0
    %1033 = vmatpush1.msra.mxu0 0.0
    %1034 = vmatprep.subr.mxu0 0.0
    %1035 = vmatpush1.msra.mxu0 0.0
    %1036 = vmatprep.subr.mxu0 0.0
    %1037 = vmatpush1.msra.mxu0 0.0
    %1038 = vmatprep.subr.mxu0 0.0
    %1039 = vmatpush1.msra.mxu0 0.0
    %1040 = vmatprep.subr.mxu0 0.0
    %1041 = vmatpush1.msra.mxu0 0.0
    %1042 = vmatprep.subr.mxu0 0.0
    %1043 = vmatpush1.msra.mxu0 0.0
    %1044 = vmatprep.subr.mxu0 0.0
    %1045 = vmatpush1.msra.mxu0 0.0
    %1046 = vmatprep.subr.mxu0 0.0
    %1047 = vmatpush1.msra.mxu0 0.0
    %1048 = vmatprep.subr.mxu0 0.0
    %1049 = vmatpush1.msra.mxu0 0.0
    %1050 = vmatprep.subr.mxu0 0.0
    %1051 = vmatpush1.msra.mxu0 0.0
    %1052 = vmatprep.subr.mxu0 0.0
    %1053 = vmatpush1.msra.mxu0 0.0
    %1054 = vmatprep.subr.mxu0 0.0
    %1055 = vmatpush1.msra.mxu0 0.0
    %1056 = vmatprep.subr.mxu0 0.0
    %1057 = vmatpush1.msra.mxu0 0.0
    %1058 = vmatprep.subr.mxu0 0.0
    %1059 = vmatpush1.msra.mxu0 0.0
    %1060 = vmatprep.subr.mxu0 0.0
    %1061 = vmatpush1.msra.mxu0 0.0
    %1062 = vmatprep.subr.mxu0 0.0
    %1063 = vmatpush1.msra.mxu0 0.0
    %1064 = vmatprep.subr.mxu0 0.0
    %1065 = vmatpush1.msra.mxu0 0.0
    %1066 = vmatprep.subr.mxu0 0.0
    %1067 = vmatpush1.msra.mxu0 0.0
    %1068 = vmatprep.subr.mxu0 0.0
    %1069 = vmatpush1.msra.mxu0 0.0
    %1070 = vmatprep.subr.mxu0 0.0
    %1071 = vmatpush1.msra.mxu0 0.0
    %1072 = vmatprep.subr.mxu0 0.0
    %1073 = vmatpush1.msra.mxu0 0.0
    %1074 = vmatprep.subr.mxu0 0.0
    %1075 = vmatpush1.msra.mxu0 0.0
    %1076 = vmatprep.subr.mxu0 0.0
    %1077 = vmatpush1.msra.mxu0 0.0
    %1078 = vmatprep.subr.mxu0 0.0
    %1079 = vmatpush1.msra.mxu0 0.0
    %1080 = vmatprep.subr.mxu0 0.0
    %1081 = vmatpush1.msra.mxu0 0.0
    %1082 = vmatprep.subr.mxu0 0.0
    %1083 = vmatpush1.msra.mxu0 0.0
    %1084 = vmatprep.subr.mxu0 0.0
    %1085 = vmatpush1.msra.mxu0 0.0
    %1086 = vmatprep.subr.mxu0 0.0
    %1087 = vmatpush1.msra.mxu0 0.0
    %1088 = vmatprep.mubr.f32.mxu0 0.0
    %1089 = vmatmul.mubr.f32.gmra.mrb[0].mxu0 %v1022
    %v1090 = vpop.f32.mrb[0].mxu0
    %v1091 = vadd.f32 0.0, %v1090
    %v1092 = vpop.f32.mrb[0].mxu0
    %1093 = vdwg.mxu0
    %v1095 = vrot.slane %v1091, 2
    %v1097 = vadd.f32 %v274, %v1095
    %v1098 = vxor.u32 %v1097, 2147483648
    %v1099 = vmul.f32 %v1098, 1.442695
    %v1100 = vpow.pop %v1099
    %v1101 = vadd.f32 %v1100, 1.0
    %v1102 = vrcp.pop %v1101
    %v1103 = vmul.f32 1.0, %v1102
    %v1104 = vtanh.pop %v1097
    %v1106 = vrot.slane %v1011, 6
    %v1108 = vmul.f32 %v1103, %v1106
    %1110 = vrot.lane.b32.xlu0 %v1104, 64
    %v1111 = vpop.permute.xlu0 %1110
    %v1113 = vmul.f32 %v1103, %v1111
    %1115 = vrot.lane.b32.xlu0 %v1113, 32
    %v1116 = vpop.permute.xlu0 %1115
    %v1118 = vadd.f32 %v1108, %v1116
    %v1119 = vtanh.pop %v1118
    %1121 = vrot.lane.b32.xlu0 %v1119, 64
    %v1122 = vpop.permute.xlu0 %1121
    %v1124 = vmul.f32 %v1103, %v1122
    %1126 = vrot.lane.b32.xlu0 %v1124, 32
    %v1127 = vpop.permute.xlu0 %1126
    %vm1129 = vcmask 261126
    %1130 = vst.msk [vmem:[#allocation8 - $0x6] sm:$0xc0] %vm1129, %v1127
    %1132 = vrot.lane.b32.xlu0 %v1118, 96
    %v1133 = vpop.permute.xlu0 %1132
    %1135 = vst.msk [vmem:[#allocation10 - $0x6] sm:$0xc0] %vm1129, %v1133
    %vm1136 = vcmask 1041408
    %v1137 = vsel %vm1136, %v380, %v486
    %vm1138 = vcmask 1043456
    %v1139 = vsel %vm1138, %v1137, %v593
    %vm1140 = vcmask 1045504
    %v1141 = vsel %vm1140, %v1139, %v700
    %v1142 = vsel %vm1136, %v804, %v910
    %v1143 = vsel %vm1138, %v1142, %v1017
    %v1144 = vsel %vm1140, %v1143, %v1124
    %v1145 = vld [vmem:[%s8] sm:$0xff]
    %v1146 = vld [vmem:[%s8 + $0x8] sm:$0xff]
    %v1147 = vld [vmem:[%s8 + $0x10] sm:$0xff]
    %v1148 = vld [vmem:[%s8 + $0x18] sm:$0xff]
    %v1149 = vld [vmem:[%s7] sm:$0xff]
    %v1150 = vld [vmem:[%s7 + $0x8] sm:$0xff]
    %v1151 = vld [vmem:[%s7 + $0x10] sm:$0xff]
    %v1152 = vld [vmem:[%s7 + $0x18] sm:$0xff]
    %v1153 = vld [vmem:[%s9] sm:$0x1]
    %v1155 = vlaneseq
    %v1156 = vshrl.u32 %v1155, 7
    %v1157 = vsub.s32 0, %v1156
    %v1158 = vrot.slane %v1153, %v1157
    %1162 = vrot.lane.b32.xlu0 %v1141, 32
    %v1163 = vpop.permute.xlu0 %1162
    %1164 = vrot.lane.b32.xlu0 %v1144, 32
    %v1165 = vpop.permute.xlu0 %1164
    %v1166 = vsel %vm195, %v1163, 0
    %v1168 = vsel %vm195, %v1165, 0
    %1170 = vmatprep.subr.mxu0 0.0
    %1171 = vmatpush1.msra.mxu0 %v1149
    %1172 = vmatprep.subr.mxu0 0.0
    %1173 = vmatpush1.msra.mxu0 %v1150
    %1174 = vmatprep.subr.mxu0 0.0
    %1175 = vmatpush1.msra.mxu0 %v1151
    %1176 = vmatprep.subr.mxu0 0.0
    %1177 = vmatpush1.msra.mxu0 %v1152
    %1178 = vmatprep.subr.mxu0 0.0
    %1179 = vmatpush1.msra.mxu0 0.0
    %1180 = vmatprep.subr.mxu0 0.0
    %1181 = vmatpush1.msra.mxu0 0.0
    %1182 = vmatprep.subr.mxu0 0.0
    %1183 = vmatpush1.msra.mxu0 0.0
    %1184 = vmatprep.subr.mxu0 0.0
    %1185 = vmatpush1.msra.mxu0 0.0
    %1186 = vmatprep.subr.mxu0 0.0
    %1187 = vmatpush1.msra.mxu0 0.0
    %1188 = vmatprep.subr.mxu0 0.0
    %1189 = vmatpush1.msra.mxu0 0.0
    %1190 = vmatprep.subr.mxu0 0.0
    %1191 = vmatpush1.msra.mxu0 0.0
    %1192 = vmatprep.subr.mxu0 0.0
    %1193 = vmatpush1.msra.mxu0 0.0
    %1194 = vmatprep.subr.mxu0 0.0
    %1195 = vmatpush1.msra.mxu0 0.0
    %1196 = vmatprep.subr.mxu0 0.0
    %1197 = vmatpush1.msra.mxu0 0.0
    %1198 = vmatprep.subr.mxu0 0.0
    %1199 = vmatpush1.msra.mxu0 0.0
    %1200 = vmatprep.subr.mxu0 0.0
    %1201 = vmatpush1.msra.mxu0 0.0
    %1202 = vmatprep.subr.mxu0 0.0
    %1203 = vmatpush1.msra.mxu0 0.0
    %1204 = vmatprep.subr.mxu0 0.0
    %1205 = vmatpush1.msra.mxu0 0.0
    %1206 = vmatprep.subr.mxu0 0.0
    %1207 = vmatpush1.msra.mxu0 0.0
    %1208 = vmatprep.subr.mxu0 0.0
    %1209 = vmatpush1.msra.mxu0 0.0
    %1210 = vmatprep.subr.mxu0 0.0
    %1211 = vmatpush1.msra.mxu0 0.0
    %1212 = vmatprep.subr.mxu0 0.0
    %1213 = vmatpush1.msra.mxu0 0.0
    %1214 = vmatprep.subr.mxu0 0.0
    %1215 = vmatpush1.msra.mxu0 0.0
    %1216 = vmatprep.subr.mxu0 0.0
    %1217 = vmatpush1.msra.mxu0 0.0
    %1218 = vmatprep.subr.mxu0 0.0
    %1219 = vmatpush1.msra.mxu0 0.0
    %1220 = vmatprep.subr.mxu0 0.0
    %1221 = vmatpush1.msra.mxu0 0.0
    %1222 = vmatprep.subr.mxu0 0.0
    %1223 = vmatpush1.msra.mxu0 0.0
    %1224 = vmatprep.subr.mxu0 0.0
    %1225 = vmatpush1.msra.mxu0 0.0
    %1226 = vmatprep.subr.mxu0 0.0
    %1227 = vmatpush1.msra.mxu0 0.0
    %1228 = vmatprep.subr.mxu0 0.0
    %1229 = vmatpush1.msra.mxu0 0.0
    %1230 = vmatprep.subr.mxu0 0.0
    %1231 = vmatpush1.msra.mxu0 0.0
    %1232 = vmatprep.subr.mxu0 0.0
    %1233 = vmatpush1.msra.mxu0 0.0
    %1234 = vmatprep.mubr.f32.mxu0 0.0
    %1235 = vmatmul.mubr.f32.gmra.mrb[0].mxu0 %v1166
    %v1236 = vpop.f32.mrb[0].mxu0
    %v1237 = vadd.f32 %v1158, %v1236
    %v1238 = vpop.f32.mrb[0].mxu0
    %1239 = vmatprep.mubr.f32.mxu0 0.0
    %1240 = vmatmul.mubr.f32.gmra.mrb[0].mxu0 %v1168
    %v1241 = vpop.f32.mrb[0].mxu0
    %v1242 = vadd.f32 %v1158, %v1241
    %v1243 = vpop.f32.mrb[0].mxu0
    %1244 = vdwg.mxu0
    %s1245 = scalar_lea.vmem [#allocation2], 2
    %v1246 = vld [vmem:[%s1245] sm:$0x3]
    %s1247 = scalar_lea.vmem [#allocation5], 2
    %v1248 = vld [vmem:[%s1247] sm:$0x3]
    %v1250 = vsel %vm195, %v1246, 0
    %1252 = vmatprep.subr.mxu0 0.0
    %1253 = vmatpush1.msra.mxu0 %v1145
    %1254 = vmatprep.subr.mxu0 0.0
    %1255 = vmatpush1.msra.mxu0 %v1146
    %1256 = vmatprep.subr.mxu0 0.0
    %1257 = vmatpush1.msra.mxu0 %v1147
    %1258 = vmatprep.subr.mxu0 0.0
    %1259 = vmatpush1.msra.mxu0 %v1148
    %1260 = vmatprep.subr.mxu0 0.0
    %1261 = vmatpush1.msra.mxu0 0.0
    %1262 = vmatprep.subr.mxu0 0.0
    %1263 = vmatpush1.msra.mxu0 0.0
    %1264 = vmatprep.subr.mxu0 0.0
    %1265 = vmatpush1.msra.mxu0 0.0
    %1266 = vmatprep.subr.mxu0 0.0
    %1267 = vmatpush1.msra.mxu0 0.0
    %1268 = vmatprep.subr.mxu0 0.0
    %1269 = vmatpush1.msra.mxu0 0.0
    %1270 = vmatprep.subr.mxu0 0.0
    %1271 = vmatpush1.msra.mxu0 0.0
    %1272 = vmatprep.subr.mxu0 0.0
    %1273 = vmatpush1.msra.mxu0 0.0
    %1274 = vmatprep.subr.mxu0 0.0
    %1275 = vmatpush1.msra.mxu0 0.0
    %1276 = vmatprep.subr.mxu0 0.0
    %1277 = vmatpush1.msra.mxu0 0.0
    %1278 = vmatprep.subr.mxu0 0.0
    %1279 = vmatpush1.msra.mxu0 0.0
    %1280 = vmatprep.subr.mxu0 0.0
    %1281 = vmatpush1.msra.mxu0 0.0
    %1282 = vmatprep.subr.mxu0 0.0
    %1283 = vmatpush1.msra.mxu0 0.0
    %1284 = vmatprep.subr.mxu0 0.0
    %1285 = vmatpush1.msra.mxu0 0.0
    %1286 = vmatprep.subr.mxu0 0.0
    %1287 = vmatpush1.msra.mxu0 0.0
    %1288 = vmatprep.subr.mxu0 0.0
    %1289 = vmatpush1.msra.mxu0 0.0
    %1290 = vmatprep.subr.mxu0 0.0
    %1291 = vmatpush1.msra.mxu0 0.0
    %1292 = vmatprep.subr.mxu0 0.0
    %1293 = vmatpush1.msra.mxu0 0.0
    %1294 = vmatprep.subr.mxu0 0.0
    %1295 = vmatpush1.msra.mxu0 0.0
    %1296 = vmatprep.subr.mxu0 0.0
    %1297 = vmatpush1.msra.mxu0 0.0
    %1298 = vmatprep.subr.mxu0 0.0
    %1299 = vmatpush1.msra.mxu0 0.0
    %1300 = vmatprep.subr.mxu0 0.0
    %1301 = vmatpush1.msra.mxu0 0.0
    %1302 = vmatprep.subr.mxu0 0.0
    %1303 = vmatpush1.msra.mxu0 0.0
    %1304 = vmatprep.subr.mxu0 0.0
    %1305 = vmatpush1.msra.mxu0 0.0
    %1306 = vmatprep.subr.mxu0 0.0
    %1307 = vmatpush1.msra.mxu0 0.0
    %1308 = vmatprep.subr.mxu0 0.0
    %1309 = vmatpush1.msra.mxu0 0.0
    %1310 = vmatprep.subr.mxu0 0.0
    %1311 = vmatpush1.msra.mxu0 0.0
    %1312 = vmatprep.subr.mxu0 0.0
    %1313 = vmatpush1.msra.mxu0 0.0
    %1314 = vmatprep.subr.mxu0 0.0
    %1315 = vmatpush1.msra.mxu0 0.0
    %1316 = vmatprep.mubr.f32.mxu0 0.0
    %1317 = vmatmul.mubr.f32.gmra.mrb[0].mxu0 %v1250
    %v1318 = vpop.f32.mrb[0].mxu0
    %v1319 = vadd.f32 0.0, %v1318
    %v1320 = vpop.f32.mrb[0].mxu0
    %1321 = vdwg.mxu0
    %v1322 = vadd.f32 %v1237, %v1319
    %v1323 = vxor.u32 %v1322, 2147483648
    %v1324 = vmul.f32 %v1323, 1.442695
    %v1325 = vpow.pop %v1324
    %v1326 = vadd.f32 %v1325, 1.0
    %v1327 = vrcp.pop %v1326
    %v1328 = vmul.f32 1.0, %v1327
    %v1329 = vtanh.pop %v1322
    %1331 = vrot.lane.b32.xlu0 %v1248, 32
    %v1332 = vpop.permute.xlu0 %1331
    %v1334 = vmul.f32 %v1328, %v1332
    %1336 = vrot.lane.b32.xlu0 %v1329, 64
    %v1337 = vpop.permute.xlu0 %1336
    %v1339 = vmul.f32 %v1328, %v1337
    %1341 = vrot.lane.b32.xlu0 %v1339, 32
    %v1342 = vpop.permute.xlu0 %1341
    %v1344 = vadd.f32 %v1334, %v1342
    %v1345 = vtanh.pop %v1344
    %1347 = vrot.lane.b32.xlu0 %v1345, 64
    %v1348 = vpop.permute.xlu0 %1347
    %v1350 = vmul.f32 %v1328, %v1348
    %1352 = vrot.lane.b32.xlu0 %v1350, 32
    %v1353 = vpop.permute.xlu0 %1352
    %v1354 = vsel %vm195, %v1353, 0
    %1356 = vmatprep.subr.mxu0 0.0
    %1357 = vmatpush1.msra.mxu0 %v1145
    %1358 = vmatprep.subr.mxu0 0.0
    %1359 = vmatpush1.msra.mxu0 %v1146
    %1360 = vmatprep.subr.mxu0 0.0
    %1361 = vmatpush1.msra.mxu0 %v1147
    %1362 = vmatprep.subr.mxu0 0.0
    %1363 = vmatpush1.msra.mxu0 %v1148
    %1364 = vmatprep.subr.mxu0 0.0
    %1365 = vmatpush1.msra.mxu0 0.0
    %1366 = vmatprep.subr.mxu0 0.0
    %1367 = vmatpush1.msra.mxu0 0.0
    %1368 = vmatprep.subr.mxu0 0.0
    %1369 = vmatpush1.msra.mxu0 0.0
    %1370 = vmatprep.subr.mxu0 0.0
    %1371 = vmatpush1.msra.mxu0 0.0
    %1372 = vmatprep.subr.mxu0 0.0
    %1373 = vmatpush1.msra.mxu0 0.0
    %1374 = vmatprep.subr.mxu0 0.0
    %1375 = vmatpush1.msra.mxu0 0.0
    %1376 = vmatprep.subr.mxu0 0.0
    %1377 = vmatpush1.msra.mxu0 0.0
    %1378 = vmatprep.subr.mxu0 0.0
    %1379 = vmatpush1.msra.mxu0 0.0
    %1380 = vmatprep.subr.mxu0 0.0
    %1381 = vmatpush1.msra.mxu0 0.0
    %1382 = vmatprep.subr.mxu0 0.0
    %1383 = vmatpush1.msra.mxu0 0.0
    %1384 = vmatprep.subr.mxu0 0.0
    %1385 = vmatpush1.msra.mxu0 0.0
    %1386 = vmatprep.subr.mxu0 0.0
    %1387 = vmatpush1.msra.mxu0 0.0
    %1388 = vmatprep.subr.mxu0 0.0
    %1389 = vmatpush1.msra.mxu0 0.0
    %1390 = vmatprep.subr.mxu0 0.0
    %1391 = vmatpush1.msra.mxu0 0.0
    %1392 = vmatprep.subr.mxu0 0.0
    %1393 = vmatpush1.msra.mxu0 0.0
    %1394 = vmatprep.subr.mxu0 0.0
    %1395 = vmatpush1.msra.mxu0 0.0
    %1396 = vmatprep.subr.mxu0 0.0
    %1397 = vmatpush1.msra.mxu0 0.0
    %1398 = vmatprep.subr.mxu0 0.0
    %1399 = vmatpush1.msra.mxu0 0.0
    %1400 = vmatprep.subr.mxu0 0.0
    %1401 = vmatpush1.msra.mxu0 0.0
    %1402 = vmatprep.subr.mxu0 0.0
    %1403 = vmatpush1.msra.mxu0 0.0
    %1404 = vmatprep.subr.mxu0 0.0
    %1405 = vmatpush1.msra.mxu0 0.0
    %1406 = vmatprep.subr.mxu0 0.0
    %1407 = vmatpush1.msra.mxu0 0.0
    %1408 = vmatprep.subr.mxu0 0.0
    %1409 = vmatpush1.msra.mxu0 0.0
    %1410 = vmatprep.subr.mxu0 0.0
    %1411 = vmatpush1.msra.mxu0 0.0
    %1412 = vmatprep.subr.mxu0 0.0
    %1413 = vmatpush1.msra.mxu0 0.0
    %1414 = vmatprep.subr.mxu0 0.0
    %1415 = vmatpush1.msra.mxu0 0.0
    %1416 = vmatprep.subr.mxu0 0.0
    %1417 = vmatpush1.msra.mxu0 0.0
    %1418 = vmatprep.subr.mxu0 0.0
    %1419 = vmatpush1.msra.mxu0 0.0
    %1420 = vmatprep.mubr.f32.mxu0 0.0
    %1421 = vmatmul.mubr.f32.gmra.mrb[0].mxu0 %v1354
    %v1422 = vpop.f32.mrb[0].mxu0
    %v1423 = vadd.f32 0.0, %v1422
    %v1424 = vpop.f32.mrb[0].mxu0
    %1425 = vdwg.mxu0
    %v1427 = vrot.slane %v1423, 6
    %v1429 = vadd.f32 %v1237, %v1427
    %v1430 = vxor.u32 %v1429, 2147483648
    %v1431 = vmul.f32 %v1430, 1.442695
    %v1432 = vpow.pop %v1431
    %v1433 = vadd.f32 %v1432, 1.0
    %v1434 = vrcp.pop %v1433
    %v1435 = vmul.f32 1.0, %v1434
    %v1436 = vtanh.pop %v1429
    %v1438 = vrot.slane %v1344, 6
    %v1440 = vmul.f32 %v1435, %v1438
    %1442 = vrot.lane.b32.xlu0 %v1436, 64
    %v1443 = vpop.permute.xlu0 %1442
    %v1445 = vmul.f32 %v1435, %v1443
    %1447 = vrot.lane.b32.xlu0 %v1445, 32
    %v1448 = vpop.permute.xlu0 %1447
    %v1450 = vadd.f32 %v1440, %v1448
    %v1451 = vtanh.pop %v1450
    %1453 = vrot.lane.b32.xlu0 %v1451, 64
    %v1454 = vpop.permute.xlu0 %1453
    %v1456 = vmul.f32 %v1435, %v1454
    %v1458 = vrot.slane %v1456, 2
    %1459 = vrot.lane.b32.xlu0 %v1458, 32
    %v1460 = vpop.permute.xlu0 %1459
    %v1461 = vsel %vm195, %v1460, 0
    %1463 = vmatprep.subr.mxu0 0.0
    %1464 = vmatpush1.msra.mxu0 %v1145
    %1465 = vmatprep.subr.mxu0 0.0
    %1466 = vmatpush1.msra.mxu0 %v1146
    %1467 = vmatprep.subr.mxu0 0.0
    %1468 = vmatpush1.msra.mxu0 %v1147
    %1469 = vmatprep.subr.mxu0 0.0
    %1470 = vmatpush1.msra.mxu0 %v1148
    %1471 = vmatprep.subr.mxu0 0.0
    %1472 = vmatpush1.msra.mxu0 0.0
    %1473 = vmatprep.subr.mxu0 0.0
    %1474 = vmatpush1.msra.mxu0 0.0
    %1475 = vmatprep.subr.mxu0 0.0
    %1476 = vmatpush1.msra.mxu0 0.0
    %1477 = vmatprep.subr.mxu0 0.0
    %1478 = vmatpush1.msra.mxu0 0.0
    %1479 = vmatprep.subr.mxu0 0.0
    %1480 = vmatpush1.msra.mxu0 0.0
    %1481 = vmatprep.subr.mxu0 0.0
    %1482 = vmatpush1.msra.mxu0 0.0
    %1483 = vmatprep.subr.mxu0 0.0
    %1484 = vmatpush1.msra.mxu0 0.0
    %1485 = vmatprep.subr.mxu0 0.0
    %1486 = vmatpush1.msra.mxu0 0.0
    %1487 = vmatprep.subr.mxu0 0.0
    %1488 = vmatpush1.msra.mxu0 0.0
    %1489 = vmatprep.subr.mxu0 0.0
    %1490 = vmatpush1.msra.mxu0 0.0
    %1491 = vmatprep.subr.mxu0 0.0
    %1492 = vmatpush1.msra.mxu0 0.0
    %1493 = vmatprep.subr.mxu0 0.0
    %1494 = vmatpush1.msra.mxu0 0.0
    %1495 = vmatprep.subr.mxu0 0.0
    %1496 = vmatpush1.msra.mxu0 0.0
    %1497 = vmatprep.subr.mxu0 0.0
    %1498 = vmatpush1.msra.mxu0 0.0
    %1499 = vmatprep.subr.mxu0 0.0
    %1500 = vmatpush1.msra.mxu0 0.0
    %1501 = vmatprep.subr.mxu0 0.0
    %1502 = vmatpush1.msra.mxu0 0.0
    %1503 = vmatprep.subr.mxu0 0.0
    %1504 = vmatpush1.msra.mxu0 0.0
    %1505 = vmatprep.subr.mxu0 0.0
    %1506 = vmatpush1.msra.mxu0 0.0
    %1507 = vmatprep.subr.mxu0 0.0
    %1508 = vmatpush1.msra.mxu0 0.0
    %1509 = vmatprep.subr.mxu0 0.0
    %1510 = vmatpush1.msra.mxu0 0.0
    %1511 = vmatprep.subr.mxu0 0.0
    %1512 = vmatpush1.msra.mxu0 0.0
    %1513 = vmatprep.subr.mxu0 0.0
    %1514 = vmatpush1.msra.mxu0 0.0
    %1515 = vmatprep.subr.mxu0 0.0
    %1516 = vmatpush1.msra.mxu0 0.0
    %1517 = vmatprep.subr.mxu0 0.0
    %1518 = vmatpush1.msra.mxu0 0.0
    %1519 = vmatprep.subr.mxu0 0.0
    %1520 = vmatpush1.msra.mxu0 0.0
    %1521 = vmatprep.subr.mxu0 0.0
    %1522 = vmatpush1.msra.mxu0 0.0
    %1523 = vmatprep.subr.mxu0 0.0
    %1524 = vmatpush1.msra.mxu0 0.0
    %1525 = vmatprep.subr.mxu0 0.0
    %1526 = vmatpush1.msra.mxu0 0.0
    %1527 = vmatprep.mubr.f32.mxu0 0.0
    %1528 = vmatmul.mubr.f32.gmra.mrb[0].mxu0 %v1461
    %v1529 = vpop.f32.mrb[0].mxu0
    %v1530 = vadd.f32 0.0, %v1529
    %v1531 = vpop.f32.mrb[0].mxu0
    %1532 = vdwg.mxu0
    %v1534 = vrot.slane %v1530, 4
    %v1536 = vadd.f32 %v1237, %v1534
    %v1537 = vxor.u32 %v1536, 2147483648
    %v1538 = vmul.f32 %v1537, 1.442695
    %v1539 = vpow.pop %v1538
    %v1540 = vadd.f32 %v1539, 1.0
    %v1541 = vrcp.pop %v1540
    %v1542 = vmul.f32 1.0, %v1541
    %v1543 = vtanh.pop %v1536
    %v1545 = vrot.slane %v1450, 6
    %v1547 = vmul.f32 %v1542, %v1545
    %1549 = vrot.lane.b32.xlu0 %v1543, 64
    %v1550 = vpop.permute.xlu0 %1549
    %v1552 = vmul.f32 %v1542, %v1550
    %1554 = vrot.lane.b32.xlu0 %v1552, 32
    %v1555 = vpop.permute.xlu0 %1554
    %v1557 = vadd.f32 %v1547, %v1555
    %v1558 = vtanh.pop %v1557
    %1560 = vrot.lane.b32.xlu0 %v1558, 64
    %v1561 = vpop.permute.xlu0 %1560
    %v1563 = vmul.f32 %v1542, %v1561
    %v1565 = vrot.slane %v1563, 4
    %1566 = vrot.lane.b32.xlu0 %v1565, 32
    %v1567 = vpop.permute.xlu0 %1566
    %v1568 = vsel %vm195, %v1567, 0
    %1570 = vmatprep.subr.mxu0 0.0
    %1571 = vmatpush1.msra.mxu0 %v1145
    %1572 = vmatprep.subr.mxu0 0.0
    %1573 = vmatpush1.msra.mxu0 %v1146
    %1574 = vmatprep.subr.mxu0 0.0
    %1575 = vmatpush1.msra.mxu0 %v1147
    %1576 = vmatprep.subr.mxu0 0.0
    %1577 = vmatpush1.msra.mxu0 %v1148
    %1578 = vmatprep.subr.mxu0 0.0
    %1579 = vmatpush1.msra.mxu0 0.0
    %1580 = vmatprep.subr.mxu0 0.0
    %1581 = vmatpush1.msra.mxu0 0.0
    %1582 = vmatprep.subr.mxu0 0.0
    %1583 = vmatpush1.msra.mxu0 0.0
    %1584 = vmatprep.subr.mxu0 0.0
    %1585 = vmatpush1.msra.mxu0 0.0
    %1586 = vmatprep.subr.mxu0 0.0
    %1587 = vmatpush1.msra.mxu0 0.0
    %1588 = vmatprep.subr.mxu0 0.0
    %1589 = vmatpush1.msra.mxu0 0.0
    %1590 = vmatprep.subr.mxu0 0.0
    %1591 = vmatpush1.msra.mxu0 0.0
    %1592 = vmatprep.subr.mxu0 0.0
    %1593 = vmatpush1.msra.mxu0 0.0
    %1594 = vmatprep.subr.mxu0 0.0
    %1595 = vmatpush1.msra.mxu0 0.0
    %1596 = vmatprep.subr.mxu0 0.0
    %1597 = vmatpush1.msra.mxu0 0.0
    %1598 = vmatprep.subr.mxu0 0.0
    %1599 = vmatpush1.msra.mxu0 0.0
    %1600 = vmatprep.subr.mxu0 0.0
    %1601 = vmatpush1.msra.mxu0 0.0
    %1602 = vmatprep.subr.mxu0 0.0
    %1603 = vmatpush1.msra.mxu0 0.0
    %1604 = vmatprep.subr.mxu0 0.0
    %1605 = vmatpush1.msra.mxu0 0.0
    %1606 = vmatprep.subr.mxu0 0.0
    %1607 = vmatpush1.msra.mxu0 0.0
    %1608 = vmatprep.subr.mxu0 0.0
    %1609 = vmatpush1.msra.mxu0 0.0
    %1610 = vmatprep.subr.mxu0 0.0
    %1611 = vmatpush1.msra.mxu0 0.0
    %1612 = vmatprep.subr.mxu0 0.0
    %1613 = vmatpush1.msra.mxu0 0.0
    %1614 = vmatprep.subr.mxu0 0.0
    %1615 = vmatpush1.msra.mxu0 0.0
    %1616 = vmatprep.subr.mxu0 0.0
    %1617 = vmatpush1.msra.mxu0 0.0
    %1618 = vmatprep.subr.mxu0 0.0
    %1619 = vmatpush1.msra.mxu0 0.0
    %1620 = vmatprep.subr.mxu0 0.0
    %1621 = vmatpush1.msra.mxu0 0.0
    %1622 = vmatprep.subr.mxu0 0.0
    %1623 = vmatpush1.msra.mxu0 0.0
    %1624 = vmatprep.subr.mxu0 0.0
    %1625 = vmatpush1.msra.mxu0 0.0
    %1626 = vmatprep.subr.mxu0 0.0
    %1627 = vmatpush1.msra.mxu0 0.0
    %1628 = vmatprep.subr.mxu0 0.0
    %1629 = vmatpush1.msra.mxu0 0.0
    %1630 = vmatprep.subr.mxu0 0.0
    %1631 = vmatpush1.msra.mxu0 0.0
    %1632 = vmatprep.subr.mxu0 0.0
    %1633 = vmatpush1.msra.mxu0 0.0
    %1634 = vmatprep.mubr.f32.mxu0 0.0
    %1635 = vmatmul.mubr.f32.gmra.mrb[0].mxu0 %v1568
    %v1636 = vpop.f32.mrb[0].mxu0
    %v1637 = vadd.f32 0.0, %v1636
    %v1638 = vpop.f32.mrb[0].mxu0
    %1639 = vdwg.mxu0
    %v1641 = vrot.slane %v1637, 2
    %v1643 = vadd.f32 %v1237, %v1641
    %v1644 = vxor.u32 %v1643, 2147483648
    %v1645 = vmul.f32 %v1644, 1.442695
    %v1646 = vpow.pop %v1645
    %v1647 = vadd.f32 %v1646, 1.0
    %v1648 = vrcp.pop %v1647
    %v1649 = vmul.f32 1.0, %v1648
    %v1650 = vtanh.pop %v1643
    %v1652 = vrot.slane %v1557, 6
    %v1654 = vmul.f32 %v1649, %v1652
    %1656 = vrot.lane.b32.xlu0 %v1650, 64
    %v1657 = vpop.permute.xlu0 %1656
    %v1659 = vmul.f32 %v1649, %v1657
    %1661 = vrot.lane.b32.xlu0 %v1659, 32
    %v1662 = vpop.permute.xlu0 %1661
    %v1664 = vadd.f32 %v1654, %v1662
    %v1665 = vtanh.pop %v1664
    %1667 = vrot.lane.b32.xlu0 %v1665, 64
    %v1668 = vpop.permute.xlu0 %1667
    %v1670 = vmul.f32 %v1649, %v1668
    %v1672 = vrot.slane %v1670, 6
    %1673 = vrot.lane.b32.xlu0 %v1672, 32
    %v1674 = vpop.permute.xlu0 %1673
    %v1675 = vsel %vm195, %v1674, 0
    %1677 = vmatprep.subr.mxu0 0.0
    %1678 = vmatpush1.msra.mxu0 %v1145
    %1679 = vmatprep.subr.mxu0 0.0
    %1680 = vmatpush1.msra.mxu0 %v1146
    %1681 = vmatprep.subr.mxu0 0.0
    %1682 = vmatpush1.msra.mxu0 %v1147
    %1683 = vmatprep.subr.mxu0 0.0
    %1684 = vmatpush1.msra.mxu0 %v1148
    %1685 = vmatprep.subr.mxu0 0.0
    %1686 = vmatpush1.msra.mxu0 0.0
    %1687 = vmatprep.subr.mxu0 0.0
    %1688 = vmatpush1.msra.mxu0 0.0
    %1689 = vmatprep.subr.mxu0 0.0
    %1690 = vmatpush1.msra.mxu0 0.0
    %1691 = vmatprep.subr.mxu0 0.0
    %1692 = vmatpush1.msra.mxu0 0.0
    %1693 = vmatprep.subr.mxu0 0.0
    %1694 = vmatpush1.msra.mxu0 0.0
    %1695 = vmatprep.subr.mxu0 0.0
    %1696 = vmatpush1.msra.mxu0 0.0
    %1697 = vmatprep.subr.mxu0 0.0
    %1698 = vmatpush1.msra.mxu0 0.0
    %1699 = vmatprep.subr.mxu0 0.0
    %1700 = vmatpush1.msra.mxu0 0.0
    %1701 = vmatprep.subr.mxu0 0.0
    %1702 = vmatpush1.msra.mxu0 0.0
    %1703 = vmatprep.subr.mxu0 0.0
    %1704 = vmatpush1.msra.mxu0 0.0
    %1705 = vmatprep.subr.mxu0 0.0
    %1706 = vmatpush1.msra.mxu0 0.0
    %1707 = vmatprep.subr.mxu0 0.0
    %1708 = vmatpush1.msra.mxu0 0.0
    %1709 = vmatprep.subr.mxu0 0.0
    %1710 = vmatpush1.msra.mxu0 0.0
    %1711 = vmatprep.subr.mxu0 0.0
    %1712 = vmatpush1.msra.mxu0 0.0
    %1713 = vmatprep.subr.mxu0 0.0
    %1714 = vmatpush1.msra.mxu0 0.0
    %1715 = vmatprep.subr.mxu0 0.0
    %1716 = vmatpush1.msra.mxu0 0.0
    %1717 = vmatprep.subr.mxu0 0.0
    %1718 = vmatpush1.msra.mxu0 0.0
    %1719 = vmatprep.subr.mxu0 0.0
    %1720 = vmatpush1.msra.mxu0 0.0
    %1721 = vmatprep.subr.mxu0 0.0
    %1722 = vmatpush1.msra.mxu0 0.0
    %1723 = vmatprep.subr.mxu0 0.0
    %1724 = vmatpush1.msra.mxu0 0.0
    %1725 = vmatprep.subr.mxu0 0.0
    %1726 = vmatpush1.msra.mxu0 0.0
    %1727 = vmatprep.subr.mxu0 0.0
    %1728 = vmatpush1.msra.mxu0 0.0
    %1729 = vmatprep.subr.mxu0 0.0
    %1730 = vmatpush1.msra.mxu0 0.0
    %1731 = vmatprep.subr.mxu0 0.0
    %1732 = vmatpush1.msra.mxu0 0.0
    %1733 = vmatprep.subr.mxu0 0.0
    %1734 = vmatpush1.msra.mxu0 0.0
    %1735 = vmatprep.subr.mxu0 0.0
    %1736 = vmatpush1.msra.mxu0 0.0
    %1737 = vmatprep.subr.mxu0 0.0
    %1738 = vmatpush1.msra.mxu0 0.0
    %1739 = vmatprep.subr.mxu0 0.0
    %1740 = vmatpush1.msra.mxu0 0.0
    %1741 = vmatprep.mubr.f32.mxu0 0.0
    %1742 = vmatmul.mubr.f32.gmra.mrb[0].mxu0 %v1675
    %v1743 = vpop.f32.mrb[0].mxu0
    %v1744 = vadd.f32 0.0, %v1743
    %v1745 = vpop.f32.mrb[0].mxu0
    %1746 = vdwg.mxu0
    %v1747 = vadd.f32 %v1242, %v1744
    %v1748 = vxor.u32 %v1747, 2147483648
    %v1749 = vmul.f32 %v1748, 1.442695
    %v1750 = vpow.pop %v1749
    %v1751 = vadd.f32 %v1750, 1.0
    %v1752 = vrcp.pop %v1751
    %v1753 = vmul.f32 1.0, %v1752
    %v1754 = vtanh.pop %v1747
    %v1756 = vrot.slane %v1664, 6
    %v1758 = vmul.f32 %v1753, %v1756
    %1760 = vrot.lane.b32.xlu0 %v1754, 64
    %v1761 = vpop.permute.xlu0 %1760
    %v1763 = vmul.f32 %v1753, %v1761
    %1765 = vrot.lane.b32.xlu0 %v1763, 32
    %v1766 = vpop.permute.xlu0 %1765
    %v1768 = vadd.f32 %v1758, %v1766
    %v1769 = vtanh.pop %v1768
    %1771 = vrot.lane.b32.xlu0 %v1769, 64
    %v1772 = vpop.permute.xlu0 %1771
    %v1774 = vmul.f32 %v1753, %v1772
    %1776 = vrot.lane.b32.xlu0 %v1774, 32
    %v1777 = vpop.permute.xlu0 %1776
    %v1778 = vsel %vm195, %v1777, 0
    %1780 = vmatprep.subr.mxu0 0.0
    %1781 = vmatpush1.msra.mxu0 %v1145
    %1782 = vmatprep.subr.mxu0 0.0
    %1783 = vmatpush1.msra.mxu0 %v1146
    %1784 = vmatprep.subr.mxu0 0.0
    %1785 = vmatpush1.msra.mxu0 %v1147
    %1786 = vmatprep.subr.mxu0 0.0
    %1787 = vmatpush1.msra.mxu0 %v1148
    %1788 = vmatprep.subr.mxu0 0.0
    %1789 = vmatpush1.msra.mxu0 0.0
    %1790 = vmatprep.subr.mxu0 0.0
    %1791 = vmatpush1.msra.mxu0 0.0
    %1792 = vmatprep.subr.mxu0 0.0
    %1793 = vmatpush1.msra.mxu0 0.0
    %1794 = vmatprep.subr.mxu0 0.0
    %1795 = vmatpush1.msra.mxu0 0.0
    %1796 = vmatprep.subr.mxu0 0.0
    %1797 = vmatpush1.msra.mxu0 0.0
    %1798 = vmatprep.subr.mxu0 0.0
    %1799 = vmatpush1.msra.mxu0 0.0
    %1800 = vmatprep.subr.mxu0 0.0
    %1801 = vmatpush1.msra.mxu0 0.0
    %1802 = vmatprep.subr.mxu0 0.0
    %1803 = vmatpush1.msra.mxu0 0.0
    %1804 = vmatprep.subr.mxu0 0.0
    %1805 = vmatpush1.msra.mxu0 0.0
    %1806 = vmatprep.subr.mxu0 0.0
    %1807 = vmatpush1.msra.mxu0 0.0
    %1808 = vmatprep.subr.mxu0 0.0
    %1809 = vmatpush1.msra.mxu0 0.0
    %1810 = vmatprep.subr.mxu0 0.0
    %1811 = vmatpush1.msra.mxu0 0.0
    %1812 = vmatprep.subr.mxu0 0.0
    %1813 = vmatpush1.msra.mxu0 0.0
    %1814 = vmatprep.subr.mxu0 0.0
    %1815 = vmatpush1.msra.mxu0 0.0
    %1816 = vmatprep.subr.mxu0 0.0
    %1817 = vmatpush1.msra.mxu0 0.0
    %1818 = vmatprep.subr.mxu0 0.0
    %1819 = vmatpush1.msra.mxu0 0.0
    %1820 = vmatprep.subr.mxu0 0.0
    %1821 = vmatpush1.msra.mxu0 0.0
    %1822 = vmatprep.subr.mxu0 0.0
    %1823 = vmatpush1.msra.mxu0 0.0
    %1824 = vmatprep.subr.mxu0 0.0
    %1825 = vmatpush1.msra.mxu0 0.0
    %1826 = vmatprep.subr.mxu0 0.0
    %1827 = vmatpush1.msra.mxu0 0.0
    %1828 = vmatprep.subr.mxu0 0.0
    %1829 = vmatpush1.msra.mxu0 0.0
    %1830 = vmatprep.subr.mxu0 0.0
    %1831 = vmatpush1.msra.mxu0 0.0
    %1832 = vmatprep.subr.mxu0 0.0
    %1833 = vmatpush1.msra.mxu0 0.0
    %1834 = vmatprep.subr.mxu0 0.0
    %1835 = vmatpush1.msra.mxu0 0.0
    %1836 = vmatprep.subr.mxu0 0.0
    %1837 = vmatpush1.msra.mxu0 0.0
    %1838 = vmatprep.subr.mxu0 0.0
    %1839 = vmatpush1.msra.mxu0 0.0
    %1840 = vmatprep.subr.mxu0 0.0
    %1841 = vmatpush1.msra.mxu0 0.0
    %1842 = vmatprep.subr.mxu0 0.0
    %1843 = vmatpush1.msra.mxu0 0.0
    %1844 = vmatprep.mubr.f32.mxu0 0.0
    %1845 = vmatmul.mubr.f32.gmra.mrb[0].mxu0 %v1778
    %v1846 = vpop.f32.mrb[0].mxu0
    %v1847 = vadd.f32 0.0, %v1846
    %v1848 = vpop.f32.mrb[0].mxu0
    %1849 = vdwg.mxu0
    %v1851 = vrot.slane %v1847, 6
    %v1853 = vadd.f32 %v1242, %v1851
    %v1854 = vxor.u32 %v1853, 2147483648
    %v1855 = vmul.f32 %v1854, 1.442695
    %v1856 = vpow.pop %v1855
    %v1857 = vadd.f32 %v1856, 1.0
    %v1858 = vrcp.pop %v1857
    %v1859 = vmul.f32 1.0, %v1858
    %v1860 = vtanh.pop %v1853
    %v1862 = vrot.slane %v1768, 6
    %v1864 = vmul.f32 %v1859, %v1862
    %1866 = vrot.lane.b32.xlu0 %v1860, 64
    %v1867 = vpop.permute.xlu0 %1866
    %v1869 = vmul.f32 %v1859, %v1867
    %1871 = vrot.lane.b32.xlu0 %v1869, 32
    %v1872 = vpop.permute.xlu0 %1871
    %v1874 = vadd.f32 %v1864, %v1872
    %v1875 = vtanh.pop %v1874
    %1877 = vrot.lane.b32.xlu0 %v1875, 64
    %v1878 = vpop.permute.xlu0 %1877
    %v1880 = vmul.f32 %v1859, %v1878
    %v1882 = vrot.slane %v1880, 2
    %1883 = vrot.lane.b32.xlu0 %v1882, 32
    %v1884 = vpop.permute.xlu0 %1883
    %v1885 = vsel %vm195, %v1884, 0
    %1887 = vmatprep.subr.mxu0 0.0
    %1888 = vmatpush1.msra.mxu0 %v1145
    %1889 = vmatprep.subr.mxu0 0.0
    %1890 = vmatpush1.msra.mxu0 %v1146
    %1891 = vmatprep.subr.mxu0 0.0
    %1892 = vmatpush1.msra.mxu0 %v1147
    %1893 = vmatprep.subr.mxu0 0.0
    %1894 = vmatpush1.msra.mxu0 %v1148
    %1895 = vmatprep.subr.mxu0 0.0
    %1896 = vmatpush1.msra.mxu0 0.0
    %1897 = vmatprep.subr.mxu0 0.0
    %1898 = vmatpush1.msra.mxu0 0.0
    %1899 = vmatprep.subr.mxu0 0.0
    %1900 = vmatpush1.msra.mxu0 0.0
    %1901 = vmatprep.subr.mxu0 0.0
    %1902 = vmatpush1.msra.mxu0 0.0
    %1903 = vmatprep.subr.mxu0 0.0
    %1904 = vmatpush1.msra.mxu0 0.0
    %1905 = vmatprep.subr.mxu0 0.0
    %1906 = vmatpush1.msra.mxu0 0.0
    %1907 = vmatprep.subr.mxu0 0.0
    %1908 = vmatpush1.msra.mxu0 0.0
    %1909 = vmatprep.subr.mxu0 0.0
    %1910 = vmatpush1.msra.mxu0 0.0
    %1911 = vmatprep.subr.mxu0 0.0
    %1912 = vmatpush1.msra.mxu0 0.0
    %1913 = vmatprep.subr.mxu0 0.0
    %1914 = vmatpush1.msra.mxu0 0.0
    %1915 = vmatprep.subr.mxu0 0.0
    %1916 = vmatpush1.msra.mxu0 0.0
    %1917 = vmatprep.subr.mxu0 0.0
    %1918 = vmatpush1.msra.mxu0 0.0
    %1919 = vmatprep.subr.mxu0 0.0
    %1920 = vmatpush1.msra.mxu0 0.0
    %1921 = vmatprep.subr.mxu0 0.0
    %1922 = vmatpush1.msra.mxu0 0.0
    %1923 = vmatprep.subr.mxu0 0.0
    %1924 = vmatpush1.msra.mxu0 0.0
    %1925 = vmatprep.subr.mxu0 0.0
    %1926 = vmatpush1.msra.mxu0 0.0
    %1927 = vmatprep.subr.mxu0 0.0
    %1928 = vmatpush1.msra.mxu0 0.0
    %1929 = vmatprep.subr.mxu0 0.0
    %1930 = vmatpush1.msra.mxu0 0.0
    %1931 = vmatprep.subr.mxu0 0.0
    %1932 = vmatpush1.msra.mxu0 0.0
    %1933 = vmatprep.subr.mxu0 0.0
    %1934 = vmatpush1.msra.mxu0 0.0
    %1935 = vmatprep.subr.mxu0 0.0
    %1936 = vmatpush1.msra.mxu0 0.0
    %1937 = vmatprep.subr.mxu0 0.0
    %1938 = vmatpush1.msra.mxu0 0.0
    %1939 = vmatprep.subr.mxu0 0.0
    %1940 = vmatpush1.msra.mxu0 0.0
    %1941 = vmatprep.subr.mxu0 0.0
    %1942 = vmatpush1.msra.mxu0 0.0
    %1943 = vmatprep.subr.mxu0 0.0
    %1944 = vmatpush1.msra.mxu0 0.0
    %1945 = vmatprep.subr.mxu0 0.0
    %1946 = vmatpush1.msra.mxu0 0.0
    %1947 = vmatprep.subr.mxu0 0.0
    %1948 = vmatpush1.msra.mxu0 0.0
    %1949 = vmatprep.subr.mxu0 0.0
    %1950 = vmatpush1.msra.mxu0 0.0
    %1951 = vmatprep.mubr.f32.mxu0 0.0
    %1952 = vmatmul.mubr.f32.gmra.mrb[0].mxu0 %v1885
    %v1953 = vpop.f32.mrb[0].mxu0
    %v1954 = vadd.f32 0.0, %v1953
    %v1955 = vpop.f32.mrb[0].mxu0
    %1956 = vdwg.mxu0
    %v1958 = vrot.slane %v1954, 4
    %v1960 = vadd.f32 %v1242, %v1958
    %v1961 = vxor.u32 %v1960, 2147483648
    %v1962 = vmul.f32 %v1961, 1.442695
    %v1963 = vpow.pop %v1962
    %v1964 = vadd.f32 %v1963, 1.0
    %v1965 = vrcp.pop %v1964
    %v1966 = vmul.f32 1.0, %v1965
    %v1967 = vtanh.pop %v1960
    %v1969 = vrot.slane %v1874, 6
    %v1971 = vmul.f32 %v1966, %v1969
    %1973 = vrot.lane.b32.xlu0 %v1967, 64
    %v1974 = vpop.permute.xlu0 %1973
    %v1976 = vmul.f32 %v1966, %v1974
    %1978 = vrot.lane.b32.xlu0 %v1976, 32
    %v1979 = vpop.permute.xlu0 %1978
    %v1981 = vadd.f32 %v1971, %v1979
    %v1982 = vtanh.pop %v1981
    %1984 = vrot.lane.b32.xlu0 %v1982, 64
    %v1985 = vpop.permute.xlu0 %1984
    %v1987 = vmul.f32 %v1966, %v1985
    %v1989 = vrot.slane %v1987, 4
    %1990 = vrot.lane.b32.xlu0 %v1989, 32
    %v1991 = vpop.permute.xlu0 %1990
    %v1992 = vsel %vm195, %v1991, 0
    %1994 = vmatprep.subr.mxu0 0.0
    %1995 = vmatpush1.msra.mxu0 %v1145
    %1996 = vmatprep.subr.mxu0 0.0
    %1997 = vmatpush1.msra.mxu0 %v1146
    %1998 = vmatprep.subr.mxu0 0.0
    %1999 = vmatpush1.msra.mxu0 %v1147
    %2000 = vmatprep.subr.mxu0 0.0
    %2001 = vmatpush1.msra.mxu0 %v1148
    %2002 = vmatprep.subr.mxu0 0.0
    %2003 = vmatpush1.msra.mxu0 0.0
    %2004 = vmatprep.subr.mxu0 0.0
    %2005 = vmatpush1.msra.mxu0 0.0
    %2006 = vmatprep.subr.mxu0 0.0
    %2007 = vmatpush1.msra.mxu0 0.0
    %2008 = vmatprep.subr.mxu0 0.0
    %2009 = vmatpush1.msra.mxu0 0.0
    %2010 = vmatprep.subr.mxu0 0.0
    %2011 = vmatpush1.msra.mxu0 0.0
    %2012 = vmatprep.subr.mxu0 0.0
    %2013 = vmatpush1.msra.mxu0 0.0
    %2014 = vmatprep.subr.mxu0 0.0
    %2015 = vmatpush1.msra.mxu0 0.0
    %2016 = vmatprep.subr.mxu0 0.0
    %2017 = vmatpush1.msra.mxu0 0.0
    %2018 = vmatprep.subr.mxu0 0.0
    %2019 = vmatpush1.msra.mxu0 0.0
    %2020 = vmatprep.subr.mxu0 0.0
    %2021 = vmatpush1.msra.mxu0 0.0
    %2022 = vmatprep.subr.mxu0 0.0
    %2023 = vmatpush1.msra.mxu0 0.0
    %2024 = vmatprep.subr.mxu0 0.0
    %2025 = vmatpush1.msra.mxu0 0.0
    %2026 = vmatprep.subr.mxu0 0.0
    %2027 = vmatpush1.msra.mxu0 0.0
    %2028 = vmatprep.subr.mxu0 0.0
    %2029 = vmatpush1.msra.mxu0 0.0
    %2030 = vmatprep.subr.mxu0 0.0
    %2031 = vmatpush1.msra.mxu0 0.0
    %2032 = vmatprep.subr.mxu0 0.0
    %2033 = vmatpush1.msra.mxu0 0.0
    %2034 = vmatprep.subr.mxu0 0.0
    %2035 = vmatpush1.msra.mxu0 0.0
    %2036 = vmatprep.subr.mxu0 0.0
    %2037 = vmatpush1.msra.mxu0 0.0
    %2038 = vmatprep.subr.mxu0 0.0
    %2039 = vmatpush1.msra.mxu0 0.0
    %2040 = vmatprep.subr.mxu0 0.0
    %2041 = vmatpush1.msra.mxu0 0.0
    %2042 = vmatprep.subr.mxu0 0.0
    %2043 = vmatpush1.msra.mxu0 0.0
    %2044 = vmatprep.subr.mxu0 0.0
    %2045 = vmatpush1.msra.mxu0 0.0
    %2046 = vmatprep.subr.mxu0 0.0
    %2047 = vmatpush1.msra.mxu0 0.0
    %2048 = vmatprep.subr.mxu0 0.0
    %2049 = vmatpush1.msra.mxu0 0.0
    %2050 = vmatprep.subr.mxu0 0.0
    %2051 = vmatpush1.msra.mxu0 0.0
    %2052 = vmatprep.subr.mxu0 0.0
    %2053 = vmatpush1.msra.mxu0 0.0
    %2054 = vmatprep.subr.mxu0 0.0
    %2055 = vmatpush1.msra.mxu0 0.0
    %2056 = vmatprep.subr.mxu0 0.0
    %2057 = vmatpush1.msra.mxu0 0.0
    %2058 = vmatprep.mubr.f32.mxu0 0.0
    %2059 = vmatmul.mubr.f32.gmra.mrb[0].mxu0 %v1992
    %v2060 = vpop.f32.mrb[0].mxu0
    %v2061 = vadd.f32 0.0, %v2060
    %v2062 = vpop.f32.mrb[0].mxu0
    %2063 = vdwg.mxu0
    %v2065 = vrot.slane %v2061, 2
    %v2067 = vadd.f32 %v1242, %v2065
    %v2068 = vxor.u32 %v2067, 2147483648
    %v2069 = vmul.f32 %v2068, 1.442695
    %v2070 = vpow.pop %v2069
    %v2071 = vadd.f32 %v2070, 1.0
    %v2072 = vrcp.pop %v2071
    %v2073 = vmul.f32 1.0, %v2072
    %v2074 = vtanh.pop %v2067
    %v2076 = vrot.slane %v1981, 6
    %v2078 = vmul.f32 %v2073, %v2076
    %2080 = vrot.lane.b32.xlu0 %v2074, 64
    %v2081 = vpop.permute.xlu0 %2080
    %v2083 = vmul.f32 %v2073, %v2081
    %2085 = vrot.lane.b32.xlu0 %v2083, 32
    %v2086 = vpop.permute.xlu0 %2085
    %v2088 = vadd.f32 %v2078, %v2086
    %v2089 = vtanh.pop %v2088
    %2091 = vrot.lane.b32.xlu0 %v2089, 64
    %v2092 = vpop.permute.xlu0 %2091
    %v2094 = vmul.f32 %v2073, %v2092
    %2096 = vrot.lane.b32.xlu0 %v2094, 32
    %v2097 = vpop.permute.xlu0 %2096
    %s2099 = scalar_lea.vmem [#allocation8], 2
    %2100 = vst.msk [vmem:[%s2099 - $0x6] sm:$0xc0] %vm1129, %v2097
    %2102 = vrot.lane.b32.xlu0 %v2088, 96
    %v2103 = vpop.permute.xlu0 %2102
    %s2105 = scalar_lea.vmem [#allocation10], 2
    %2106 = vst.msk [vmem:[%s2105 - $0x6] sm:$0xc0] %vm1129, %v2103
    %v2107 = vld [vmem:[%s10] sm:$0xff]
    %v2108 = vld [vmem:[%s10 + $0x8] sm:$0xff]
    %v2109 = vld [vmem:[%s10 + $0x10] sm:$0xff]
    %v2110 = vld [vmem:[%s10 + $0x18] sm:$0xff]
    %v2111 = vld [vmem:[%s11] sm:$0x1]
    %v2113 = vlaneseq
    %v2114 = vshrl.u32 %v2113, 7
    %v2115 = vsub.s32 0, %v2114
    %v2116 = vrot.slane %v2111, %v2115
    %v2118 = vrot.slane %v2094, 6
    %2119 = vrot.lane.b32.xlu0 %v2118, 32
    %v2120 = vpop.permute.xlu0 %2119
    %v2121 = vsel %vm195, %v2120, 0
    %2123 = vmatprep.subr.mxu0 0.0
    %2124 = vmatpush1.msra.mxu0 %v2107
    %2125 = vmatprep.subr.mxu0 0.0
    %2126 = vmatpush1.msra.mxu0 %v2108
    %2127 = vmatprep.subr.mxu0 0.0
    %2128 = vmatpush1.msra.mxu0 %v2109
    %2129 = vmatprep.subr.mxu0 0.0
    %2130 = vmatpush1.msra.mxu0 %v2110
    %2131 = vmatprep.subr.mxu0 0.0
    %2132 = vmatpush1.msra.mxu0 0.0
    %2133 = vmatprep.subr.mxu0 0.0
    %2134 = vmatpush1.msra.mxu0 0.0
    %2135 = vmatprep.subr.mxu0 0.0
    %2136 = vmatpush1.msra.mxu0 0.0
    %2137 = vmatprep.subr.mxu0 0.0
    %2138 = vmatpush1.msra.mxu0 0.0
    %2139 = vmatprep.subr.mxu0 0.0
    %2140 = vmatpush1.msra.mxu0 0.0
    %2141 = vmatprep.subr.mxu0 0.0
    %2142 = vmatpush1.msra.mxu0 0.0
    %2143 = vmatprep.subr.mxu0 0.0
    %2144 = vmatpush1.msra.mxu0 0.0
    %2145 = vmatprep.subr.mxu0 0.0
    %2146 = vmatpush1.msra.mxu0 0.0
    %2147 = vmatprep.subr.mxu0 0.0
    %2148 = vmatpush1.msra.mxu0 0.0
    %2149 = vmatprep.subr.mxu0 0.0
    %2150 = vmatpush1.msra.mxu0 0.0
    %2151 = vmatprep.subr.mxu0 0.0
    %2152 = vmatpush1.msra.mxu0 0.0
    %2153 = vmatprep.subr.mxu0 0.0
    %2154 = vmatpush1.msra.mxu0 0.0
    %2155 = vmatprep.subr.mxu0 0.0
    %2156 = vmatpush1.msra.mxu0 0.0
    %2157 = vmatprep.subr.mxu0 0.0
    %2158 = vmatpush1.msra.mxu0 0.0
    %2159 = vmatprep.subr.mxu0 0.0
    %2160 = vmatpush1.msra.mxu0 0.0
    %2161 = vmatprep.subr.mxu0 0.0
    %2162 = vmatpush1.msra.mxu0 0.0
    %2163 = vmatprep.subr.mxu0 0.0
    %2164 = vmatpush1.msra.mxu0 0.0
    %2165 = vmatprep.subr.mxu0 0.0
    %2166 = vmatpush1.msra.mxu0 0.0
    %2167 = vmatprep.subr.mxu0 0.0
    %2168 = vmatpush1.msra.mxu0 0.0
    %2169 = vmatprep.subr.mxu0 0.0
    %2170 = vmatpush1.msra.mxu0 0.0
    %2171 = vmatprep.subr.mxu0 0.0
    %2172 = vmatpush1.msra.mxu0 0.0
    %2173 = vmatprep.subr.mxu0 0.0
    %2174 = vmatpush1.msra.mxu0 0.0
    %2175 = vmatprep.subr.mxu0 0.0
    %2176 = vmatpush1.msra.mxu0 0.0
    %2177 = vmatprep.subr.mxu0 0.0
    %2178 = vmatpush1.msra.mxu0 0.0
    %2179 = vmatprep.subr.mxu0 0.0
    %2180 = vmatpush1.msra.mxu0 0.0
    %2181 = vmatprep.subr.mxu0 0.0
    %2182 = vmatpush1.msra.mxu0 0.0
    %2183 = vmatprep.subr.mxu0 0.0
    %2184 = vmatpush1.msra.mxu0 0.0
    %2185 = vmatprep.subr.mxu0 0.0
    %2186 = vmatpush1.msra.mxu0 0.0
    %2187 = vmatprep.mubr.f32.mxu0 0.0
    %2188 = vmatmul.mubr.f32.gmra.mrb[0].mxu0 %v2121
    %v2189 = vpop.f32.mrb[0].mxu0
    %v2190 = vadd.f32 %v2116, %v2189
    %v2191 = vpop.f32.mrb[0].mxu0
    %2192 = vdwg.mxu0
    %vm2193 = vcmask 25600
    %2194 = vst.msk [vmem:[#allocation7] sm:$0x3] %vm2193, %v2190
    // Predicated region
    $region58: #{tpu_custom_call.1} parent=1 // pred_check
      _
    $region59: #{tpu_custom_call.1} parent=1 // pred_check_branch
      %2196 = sbr.rel (0) target = $region61
    $region60: #{tpu_custom_call.1} parent=1 // pred_region
      %s2198 = ssub.s32 32, 32
      %2199 = vsyncadd [#allocation4], %s2198
      %s2201 = sshll.u32 [#allocation7], 4
      %s2202 = int_to_ptr.vmem [resolvable:$true] %s2201
      %2204 = dma.vmem_to_hbm [thread:$0]  %s2202, 32, %s12, [#allocation4]
    $region61: #{tpu_custom_call.1} parent=1 // pred_fallthru
      _
    // Predicated region
    $region62: #{tpu_custom_call.1} parent=1 // pred_check
      _
    $region63: #{tpu_custom_call.1} parent=1 // pred_check_branch
      %2206 = sbr.rel (0) target = $region65
    $region64: #{tpu_custom_call.1} parent=1 // pred_region
      %s2208 = ssub.s32 64, 64
      %2209 = vsyncadd [#allocation9], %s2208
      %s2210 = sshll.u32 [#allocation8], 4
      %s2211 = int_to_ptr.vmem [resolvable:$true] %s2210
      %2216 = dma.vmem_to_hbm [thread:$0]  %s2211, 64, %s13, [#allocation9], 32, 32, 2
    $region65: #{tpu_custom_call.1} parent=1 // pred_fallthru
      _
    // Predicated region
    $region66: #{tpu_custom_call.1} parent=1 // pred_check
      _
    $region67: #{tpu_custom_call.1} parent=1 // pred_check_branch
      %2218 = sbr.rel (0) target = $region69
    $region68: #{tpu_custom_call.1} parent=1 // pred_region
      %s2220 = ssub.s32 64, 64
      %2221 = vsyncadd [#allocation9], %s2220
      %s2222 = sshll.u32 [#allocation10], 4
      %s2223 = int_to_ptr.vmem [resolvable:$true] %s2222
      %2228 = dma.vmem_to_hbm [thread:$0]  %s2223, 64, %s14, [#allocation9], 32, 32, 2
    $region69: #{tpu_custom_call.1} parent=1 // pred_fallthru
      _
    // Predicated region
    $region70: #{tpu_custom_call.1} parent=1 // pred_check
      _
    $region71: #{tpu_custom_call.1} parent=1 // pred_check_branch
      %2230 = sbr.rel (0) target = $region73
    $region72: #{tpu_custom_call.1} parent=1 // pred_region
      %2231 = dma.done [#allocation4], 32
    $region73: #{tpu_custom_call.1} parent=1 // pred_fallthru
      _
    // Predicated region
    $region74: #{tpu_custom_call.1} parent=1 // pred_check
      _
    $region75: #{tpu_custom_call.1} parent=1 // pred_check_branch
      %2233 = sbr.rel (0) target = $region77
    $region76: #{tpu_custom_call.1} parent=1 // pred_region
      %2234 = dma.done [#allocation9], 64
    $region77: #{tpu_custom_call.1} parent=1 // pred_fallthru
      _
    // Predicated region
    $region78: #{tpu_custom_call.1} parent=1 // pred_check
      _
    $region79: #{tpu_custom_call.1} parent=1 // pred_check_branch
      %2236 = sbr.rel (0) target = $region81
    $region80: #{tpu_custom_call.1} parent=1 // pred_region
      %2237 = dma.done [#allocation9], 64
    $region81: #{tpu_custom_call.1} parent=1 // pred_fallthru
      _
    %2238 = vsyncpa [#allocation3], 1
    %2239 = vsyncpa [#allocation6], 1
    %2240 = vsyncpa [#allocation4], 1
    %2241 = vsyncpa [#allocation9], 1

</llo_original>
